<compile_context>
chip_gen: v5e
topology: v5e:2x2
jax: 0.10.0
libtpu: 0.0.40
codegen_flags: <defaults>
</compile_context>

<pallas_src>
import functools

import jax
import jax.numpy as jnp
from jax.experimental import pallas as pl
from jax.experimental.pallas import tpu as pltpu


def _phase_conv_kernel(x_ref, w_ref, b_ref, o_ref, *, TH, W, C, Co):
    """One (batch, row-tile) grid step.

    x_ref : (1, H+2, W+2, C)   zero-padded ORIGINAL-resolution image (NHWC), block
                               index constant over row tiles -> fetched once per n.
    w_ref : (16, Co, C)        phase-folded weights, t = ((p*2+q)*2 + a)*2 + b.
    b_ref : (Co, 1)            bias.
    o_ref : (1, 4, Co, TH*W)   per-phase, lane-dense output tile (pixels on lanes).
    """
    i = pl.program_id(1)
    r0 = pl.multiple_of(i * TH, TH)

    # Padded-original rows [r0, r0 + TH + 2) cover every tap of output rows
    # [2*r0, 2*(r0 + TH)).
    xt = x_ref[0, pl.ds(r0, TH + 2), :, :]                     # (TH+2, W+2, C)

    n_pix = TH * W
    # The 9 distinct original-resolution tap slices (row/col offsets 0..2), shared
    # by the 4 output phases.  The reshape only collapses leading dims; the minor
    # (lane) axis C is untouched.
    pieces = {}
    for dr in range(3):
        for dc in range(3):
            pieces[(dr, dc)] = xt[dr:dr + TH, dc:dc + W, :].reshape(n_pix, C)

    bias = b_ref[...]                                          # (Co, 1) -> broadcasts
    for p in range(2):
        for q in range(2):
            acc = None
            for a in range(2):
                for b in range(2):
                    t = ((p * 2 + q) * 2 + a) * 2 + b
                    # (Co, C) . (n_pix, C)^T -> (Co, n_pix): the contraction itself
                    # places pixels on the lane axis, so no transposed / lane-sparse
                    # patch is ever materialized in VMEM.
                    d = jax.lax.dot_general(
                        w_ref[t], pieces[(p + a, q + b)],
                        dimension_numbers=(((1,), (1,)), ((), ())),
                        preferred_element_type=jnp.float32)
                    acc = d if acc is None else acc + d
            # Full-lane-width store of one phase tile.
            o_ref[0, p * 2 + q] = (acc + bias).astype(o_ref.dtype)


def _pick_row_tile(H, W, C, Co, budget_bytes):
    """Largest original-row tile TH whose per-step VMEM footprint fits the budget.

    Valid TH: the full extent H, or a divisor of H with a 128-aligned output lane
    width (TH*W % 128 == 0) so stores stay unmasked.
    """
    def footprint(th):
        in_block = (H + 2) * (W + 2) * C * 4        # resident padded image (x2 buf)
        out_block = 4 * Co * th * W * 4             # per-phase output tile (x2 buf)
        params = 16 * Co * C * 4 + Co * 4
        temps = (9 * C + 4 * Co) * th * W * 4       # tap slices + phase accumulators
        return 2 * in_block + 2 * out_block + params + temps

    cands = [H] + [t for t in range(H - 1, 0, -1)
                   if H % t == 0 and (t * W) % 128 == 0]
    for th in cands:                                # largest first
        if footprint(th) <= budget_bytes:
            return th, footprint(th)
    return cands[-1], footprint(cands[-1])


def upsample_forward(x_nchw, w_oihw=None, bias=None, use_conv=True):
    """Forward of Upsample(channels, use_conv, dims=2, padding=1).

    x_nchw : (N, C, H, W) float32
    w_oihw : (Co, C, 3, 3) float32   (ignored if use_conv=False)
    bias   : (Co,) float32 or None   (ignored if use_conv=False)
    returns (N, Co, 2H, 2W) float32  (Co == C when use_conv=False)
    """
    N, C, H, W = x_nchw.shape

    if not use_conv:
        # Pure nearest-neighbour data movement; nothing worth a custom kernel.
        return jnp.repeat(jnp.repeat(x_nchw, 2, axis=2), 2, axis=3)

    Co = w_oihw.shape[0]
    if bias is None:
        bias = jnp.zeros((Co,), jnp.float32)

    # --- wrapper-side prep, ORIGINAL resolution only (the 2x upsample lives in the
    # --- folded weights; no 4x intermediate is ever materialized in HBM) ---------
    x_pad = jnp.pad(jnp.transpose(x_nchw, (0, 2, 3, 1)),
                    ((0, 0), (1, 1), (1, 1), (0, 0)))          # (N, H+2, W+2, C)

    # Phase folding matrices: F[phase, tap, dh] selects/sums the 3 conv taps that
    # alias each of the 2 original pixels touched by that output phase.
    F = jnp.array([[[1., 0., 0.], [0., 1., 1.]],
                   [[1., 1., 0.], [0., 0., 1.]]], dtype=jnp.float32)
    wf = jnp.einsum('pah,qbv,ochv->pqaboc', F, F, w_oihw.astype(jnp.float32))
    w16 = wf.reshape(16, Co, C)                                # t = ((p*2+q)*2+a)*2+b
    b2 = bias.astype(jnp.float32).reshape(Co, 1)

    TH, step_bytes = _pick_row_tile(H, W, C, Co, budget_bytes=32 * 1024 * 1024)
    n_pix = TH * W
    grid = (N, H // TH)

    kernel = functools.partial(_phase_conv_kernel, TH=TH, W=W, C=C, Co=Co)

    cost = pl.CostEstimate(
        flops=int(2 * N * Co * (2 * H) * (2 * W) * 4 * C),     # 4C MACs / output px
        transcendentals=0,
        bytes_accessed=int(4 * (x_pad.size + w16.size + b2.size
                                + N * 4 * Co * H * W)),
    )

    out_ph = pl.pallas_call(
        kernel,
        out_shape=jax.ShapeDtypeStruct((N, 4, Co, H * W), jnp.float32),
        grid_spec=pltpu.PrefetchScalarGridSpec(
            num_scalar_prefetch=0,
            grid=grid,
            in_specs=[
                # Full padded image per batch element; constant block index across
                # the row-tile axis -> no re-DMA across row tiles.
                pl.BlockSpec((1, H + 2, W + 2, C), lambda n, i: (n, 0, 0, 0)),
                pl.BlockSpec((16, Co, C), lambda n, i: (0, 0, 0)),   # resident weight
                pl.BlockSpec((Co, 1), lambda n, i: (0, 0)),          # resident bias
            ],
            out_specs=pl.BlockSpec((1, 4, Co, n_pix), lambda n, i: (n, 0, 0, i)),
        ),
        compiler_params=pltpu.CompilerParams(
            dimension_semantics=("parallel", "parallel"),
            vmem_limit_bytes=int(min(48 * 1024 * 1024,
                                     step_bytes + 16 * 1024 * 1024)),
        ),
        cost_estimate=cost,
    )(x_pad, w16, b2)

    # Phase-separated (N, [p,q], Co, H, W) -> NCHW (N, Co, 2H, 2W): one free-order
    # reshape plus a single fused XLA transpose.
    out6 = out_ph.reshape(N, 2, 2, Co, H, W)
    return jnp.transpose(out6, (0, 3, 4, 1, 5, 2)).reshape(N, Co, 2 * H, 2 * W)


def _reference(x_nchw, w_oihw, bias):
    """Pure-JAX reference matching F.interpolate(nearest, 2x) + Conv2d(3, pad=1)."""
    x_up = jnp.repeat(jnp.repeat(x_nchw, 2, axis=2), 2, axis=3)
    y = jax.lax.conv_general_dilated(
        x_up, w_oihw, window_strides=(1, 1), padding=((1, 1), (1, 1)),
        dimension_numbers=("NCHW", "OIHW", "NCHW"))
    return y + bias[None, :, None, None]


if __name__ == "__main__":
    # Module config: Upsample(channels=4, use_conv=True, dims=2) -> out_channels=4
    N, C, H, W = 2, 4, 16, 16
    Co = C

    key = jax.random.PRNGKey(0)
    kx, kw, kb = jax.random.split(key, 3)
    x = jax.random.normal(kx, (N, C, H, W), dtype=jnp.float32)
    # Synthetic conv parameters (PyTorch shapes: (Co, C, 3, 3), (Co,))
    w = jax.random.normal(kw, (Co, C, 3, 3), dtype=jnp.float32) * 0.1
    b = jax.random.normal(kb, (Co,), dtype=jnp.float32) * 0.1

    out = jax.block_until_ready(upsample_forward(x, w, b, use_conv=True))
    ref = jax.block_until_ready(_reference(x, w, b))
    assert out.shape == (N, Co, 2 * H, 2 * W), out.shape
    assert jnp.allclose(out, ref, atol=1e-4, rtol=1e-4), \
        float(jnp.max(jnp.abs(out - ref)))

    # Bias-free conv config (previously crashed).
    out_nb = jax.block_until_ready(upsample_forward(x, w, None, use_conv=True))
    ref_nb = jax.block_until_ready(_reference(x, w, jnp.zeros((Co,), jnp.float32)))
    assert jnp.allclose(out_nb, ref_nb, atol=1e-4, rtol=1e-4)

    # use_conv=False branch (pure upsample, plain JAX).
    out_nc = jax.block_until_ready(upsample_forward(x, use_conv=False))
    ref_nc = jnp.repeat(jnp.repeat(x, 2, axis=2), 2, axis=3)
    assert out_nc.shape == (N, C, 2 * H, 2 * W)
    assert jnp.allclose(out_nc, ref_nc)

    print("KERNEL_OK")
</pallas_src>

<mosaic_0001>
module attributes {stable_mosaic.version = 11 : i64} {
  func.func @_phase_conv_kernel(%arg0: i32, %arg1: i32, %arg2: memref<1x18x18x4xf32, #tpu.memory_space<vmem>>, %arg3: memref<16x4x4xf32, #tpu.memory_space<vmem>>, %arg4: memref<4x1xf32, #tpu.memory_space<vmem>>, %arg5: memref<1x4x4x256xf32, #tpu.memory_space<vmem>>) attributes {dimension_semantics = [#tpu.dimension_semantics<parallel>, #tpu.dimension_semantics<parallel>], iteration_bounds = array<i64: 2, 1>, scalar_prefetch = 0 : i64, scratch_operands = 0 : i64, tpu.core_type = #tpu.core_type<tc>, window_params = [{transform_indices = @transform_0, window_bounds = array<i64: 1, 18, 18, 4>}, {pipeline_mode = #tpu.pipeline_mode<synchronous>, transform_indices = @transform_1, window_bounds = array<i64: 16, 4, 4>}, {pipeline_mode = #tpu.pipeline_mode<synchronous>, transform_indices = @transform_2, window_bounds = array<i64: 4, 1>}, {transform_indices = @transform_3, window_bounds = array<i64: 1, 4, 4, 256>}]} {
    %c16_i32 = arith.constant 16 : i32
    %0 = arith.muli %arg1, %c16_i32 : i32
    %1 = tpu.assume_multiple %0, 16 : i32
    %c0 = arith.constant 0 : index
    %2 = arith.index_cast %1 : i32 to index
    %c0_0 = arith.constant 0 : index
    %c0_1 = arith.constant 0 : index
    %3 = vector.load %arg2[%c0, %2, %c0_0, %c0_1] : memref<1x18x18x4xf32, #tpu.memory_space<vmem>>, vector<1x18x18x4xf32>
    %4 = vector.shape_cast %3 : vector<1x18x18x4xf32> to vector<18x18x4xf32>
    %5 = vector.extract_strided_slice %4 {offsets = [0, 0, 0], sizes = [16, 16, 4], strides = [1, 1, 1]} : vector<18x18x4xf32> to vector<16x16x4xf32>
    %6 = vector.shape_cast %5 : vector<16x16x4xf32> to vector<256x4xf32>
    %7 = vector.extract_strided_slice %4 {offsets = [0, 1, 0], sizes = [16, 16, 4], strides = [1, 1, 1]} : vector<18x18x4xf32> to vector<16x16x4xf32>
    %8 = vector.shape_cast %7 : vector<16x16x4xf32> to vector<256x4xf32>
    %9 = vector.extract_strided_slice %4 {offsets = [0, 2, 0], sizes = [16, 16, 4], strides = [1, 1, 1]} : vector<18x18x4xf32> to vector<16x16x4xf32>
    %10 = vector.shape_cast %9 : vector<16x16x4xf32> to vector<256x4xf32>
    %11 = vector.extract_strided_slice %4 {offsets = [1, 0, 0], sizes = [16, 16, 4], strides = [1, 1, 1]} : vector<18x18x4xf32> to vector<16x16x4xf32>
    %12 = vector.shape_cast %11 : vector<16x16x4xf32> to vector<256x4xf32>
    %13 = vector.extract_strided_slice %4 {offsets = [1, 1, 0], sizes = [16, 16, 4], strides = [1, 1, 1]} : vector<18x18x4xf32> to vector<16x16x4xf32>
    %14 = vector.shape_cast %13 : vector<16x16x4xf32> to vector<256x4xf32>
    %15 = vector.extract_strided_slice %4 {offsets = [1, 2, 0], sizes = [16, 16, 4], strides = [1, 1, 1]} : vector<18x18x4xf32> to vector<16x16x4xf32>
    %16 = vector.shape_cast %15 : vector<16x16x4xf32> to vector<256x4xf32>
    %17 = vector.extract_strided_slice %4 {offsets = [2, 0, 0], sizes = [16, 16, 4], strides = [1, 1, 1]} : vector<18x18x4xf32> to vector<16x16x4xf32>
    %18 = vector.shape_cast %17 : vector<16x16x4xf32> to vector<256x4xf32>
    %19 = vector.extract_strided_slice %4 {offsets = [2, 1, 0], sizes = [16, 16, 4], strides = [1, 1, 1]} : vector<18x18x4xf32> to vector<16x16x4xf32>
    %20 = vector.shape_cast %19 : vector<16x16x4xf32> to vector<256x4xf32>
    %21 = vector.extract_strided_slice %4 {offsets = [2, 2, 0], sizes = [16, 16, 4], strides = [1, 1, 1]} : vector<18x18x4xf32> to vector<16x16x4xf32>
    %22 = vector.shape_cast %21 : vector<16x16x4xf32> to vector<256x4xf32>
    %c0_2 = arith.constant 0 : index
    %c0_3 = arith.constant 0 : index
    %23 = vector.load %arg4[%c0_2, %c0_3] : memref<4x1xf32, #tpu.memory_space<vmem>>, vector<4x1xf32>
    %c0_4 = arith.constant 0 : index
    %c0_5 = arith.constant 0 : index
    %c0_6 = arith.constant 0 : index
    %24 = vector.load %arg3[%c0_4, %c0_5, %c0_6] : memref<16x4x4xf32, #tpu.memory_space<vmem>>, vector<1x4x4xf32>
    %25 = vector.shape_cast %24 : vector<1x4x4xf32> to vector<4x4xf32>
    %cst = arith.constant dense<0.000000e+00> : vector<4x256xf32>
    %26 = tpu.matmul %25, %6, %cst {dimension_numbers = #tpu.dot_dimension_numbers<[1], [1], [0], [0], [0, 0, 1, 0], [], []>} : vector<4x4xf32>, vector<256x4xf32>, vector<4x256xf32> -> vector<4x256xf32>
    %c1 = arith.constant 1 : index
    %c0_7 = arith.constant 0 : index
    %c0_8 = arith.constant 0 : index
    %27 = vector.load %arg3[%c1, %c0_7, %c0_8] : memref<16x4x4xf32, #tpu.memory_space<vmem>>, vector<1x4x4xf32>
    %28 = vector.shape_cast %27 : vector<1x4x4xf32> to vector<4x4xf32>
    %cst_9 = arith.constant dense<0.000000e+00> : vector<4x256xf32>
    %29 = tpu.matmul %28, %8, %cst_9 {dimension_numbers = #tpu.dot_dimension_numbers<[1], [1], [0], [0], [0, 0, 1, 0], [], []>} : vector<4x4xf32>, vector<256x4xf32>, vector<4x256xf32> -> vector<4x256xf32>
    %30 = arith.addf %26, %29 : vector<4x256xf32>
    %c2 = arith.constant 2 : index
    %c0_10 = arith.constant 0 : index
    %c0_11 = arith.constant 0 : index
    %31 = vector.load %arg3[%c2, %c0_10, %c0_11] : memref<16x4x4xf32, #tpu.memory_space<vmem>>, vector<1x4x4xf32>
    %32 = vector.shape_cast %31 : vector<1x4x4xf32> to vector<4x4xf32>
    %cst_12 = arith.constant dense<0.000000e+00> : vector<4x256xf32>
    %33 = tpu.matmul %32, %12, %cst_12 {dimension_numbers = #tpu.dot_dimension_numbers<[1], [1], [0], [0], [0, 0, 1, 0], [], []>} : vector<4x4xf32>, vector<256x4xf32>, vector<4x256xf32> -> vector<4x256xf32>
    %34 = arith.addf %30, %33 : vector<4x256xf32>
    %c3 = arith.constant 3 : index
    %c0_13 = arith.constant 0 : index
    %c0_14 = arith.constant 0 : index
    %35 = vector.load %arg3[%c3, %c0_13, %c0_14] : memref<16x4x4xf32, #tpu.memory_space<vmem>>, vector<1x4x4xf32>
    %36 = vector.shape_cast %35 : vector<1x4x4xf32> to vector<4x4xf32>
    %cst_15 = arith.constant dense<0.000000e+00> : vector<4x256xf32>
    %37 = tpu.matmul %36, %14, %cst_15 {dimension_numbers = #tpu.dot_dimension_numbers<[1], [1], [0], [0], [0, 0, 1, 0], [], []>} : vector<4x4xf32>, vector<256x4xf32>, vector<4x256xf32> -> vector<4x256xf32>
    %38 = arith.addf %34, %37 : vector<4x256xf32>
    %39 = vector.broadcast %23 : vector<4x1xf32> to vector<4x256xf32>
    %40 = arith.addf %38, %39 : vector<4x256xf32>
    %c0_16 = arith.constant 0 : index
    %c0_17 = arith.constant 0 : index
    %c0_18 = arith.constant 0 : index
    %c0_19 = arith.constant 0 : index
    %41 = vector.load %arg5[%c0_16, %c0_17, %c0_18, %c0_19] : memref<1x4x4x256xf32, #tpu.memory_space<vmem>>, vector<1x1x4x256xf32>
    %42 = vector.shape_cast %41 : vector<1x1x4x256xf32> to vector<4x256xf32>
    %43 = vector.shape_cast %40 : vector<4x256xf32> to vector<1x1x4x256xf32>
    tpu.vector_store %arg5[%c0_16, %c0_17, %c0_18, %c0_19], %43 {strides = array<i32>} : memref<1x4x4x256xf32, #tpu.memory_space<vmem>>, vector<1x1x4x256xf32>,
    %c4 = arith.constant 4 : index
    %c0_20 = arith.constant 0 : index
    %c0_21 = arith.constant 0 : index
    %44 = vector.load %arg3[%c4, %c0_20, %c0_21] : memref<16x4x4xf32, #tpu.memory_space<vmem>>, vector<1x4x4xf32>
    %45 = vector.shape_cast %44 : vector<1x4x4xf32> to vector<4x4xf32>
    %cst_22 = arith.constant dense<0.000000e+00> : vector<4x256xf32>
    %46 = tpu.matmul %45, %8, %cst_22 {dimension_numbers = #tpu.dot_dimension_numbers<[1], [1], [0], [0], [0, 0, 1, 0], [], []>} : vector<4x4xf32>, vector<256x4xf32>, vector<4x256xf32> -> vector<4x256xf32>
    %c5 = arith.constant 5 : index
    %c0_23 = arith.constant 0 : index
    %c0_24 = arith.constant 0 : index
    %47 = vector.load %arg3[%c5, %c0_23, %c0_24] : memref<16x4x4xf32, #tpu.memory_space<vmem>>, vector<1x4x4xf32>
    %48 = vector.shape_cast %47 : vector<1x4x4xf32> to vector<4x4xf32>
    %cst_25 = arith.constant dense<0.000000e+00> : vector<4x256xf32>
    %49 = tpu.matmul %48, %10, %cst_25 {dimension_numbers = #tpu.dot_dimension_numbers<[1], [1], [0], [0], [0, 0, 1, 0], [], []>} : vector<4x4xf32>, vector<256x4xf32>, vector<4x256xf32> -> vector<4x256xf32>
    %50 = arith.addf %46, %49 : vector<4x256xf32>
    %c6 = arith.constant 6 : index
    %c0_26 = arith.constant 0 : index
    %c0_27 = arith.constant 0 : index
    %51 = vector.load %arg3[%c6, %c0_26, %c0_27] : memref<16x4x4xf32, #tpu.memory_space<vmem>>, vector<1x4x4xf32>
    %52 = vector.shape_cast %51 : vector<1x4x4xf32> to vector<4x4xf32>
    %cst_28 = arith.constant dense<0.000000e+00> : vector<4x256xf32>
    %53 = tpu.matmul %52, %14, %cst_28 {dimension_numbers = #tpu.dot_dimension_numbers<[1], [1], [0], [0], [0, 0, 1, 0], [], []>} : vector<4x4xf32>, vector<256x4xf32>, vector<4x256xf32> -> vector<4x256xf32>
    %54 = arith.addf %50, %53 : vector<4x256xf32>
    %c7 = arith.constant 7 : index
    %c0_29 = arith.constant 0 : index
    %c0_30 = arith.constant 0 : index
    %55 = vector.load %arg3[%c7, %c0_29, %c0_30] : memref<16x4x4xf32, #tpu.memory_space<vmem>>, vector<1x4x4xf32>
    %56 = vector.shape_cast %55 : vector<1x4x4xf32> to vector<4x4xf32>
    %cst_31 = arith.constant dense<0.000000e+00> : vector<4x256xf32>
    %57 = tpu.matmul %56, %16, %cst_31 {dimension_numbers = #tpu.dot_dimension_numbers<[1], [1], [0], [0], [0, 0, 1, 0], [], []>} : vector<4x4xf32>, vector<256x4xf32>, vector<4x256xf32> -> vector<4x256xf32>
    %58 = arith.addf %54, %57 : vector<4x256xf32>
    %59 = vector.broadcast %23 : vector<4x1xf32> to vector<4x256xf32>
    %60 = arith.addf %58, %59 : vector<4x256xf32>
    %c0_32 = arith.constant 0 : index
    %c1_33 = arith.constant 1 : index
    %c0_34 = arith.constant 0 : index
    %c0_35 = arith.constant 0 : index
    %61 = vector.load %arg5[%c0_32, %c1_33, %c0_34, %c0_35] : memref<1x4x4x256xf32, #tpu.memory_space<vmem>>, vector<1x1x4x256xf32>
    %62 = vector.shape_cast %61 : vector<1x1x4x256xf32> to vector<4x256xf32>
    %63 = vector.shape_cast %60 : vector<4x256xf32> to vector<1x1x4x256xf32>
    tpu.vector_store %arg5[%c0_32, %c1_33, %c0_34, %c0_35], %63 {strides = array<i32>} : memref<1x4x4x256xf32, #tpu.memory_space<vmem>>, vector<1x1x4x256xf32>,
    %c8 = arith.constant 8 : index
    %c0_36 = arith.constant 0 : index
    %c0_37 = arith.constant 0 : index
    %64 = vector.load %arg3[%c8, %c0_36, %c0_37] : memref<16x4x4xf32, #tpu.memory_space<vmem>>, vector<1x4x4xf32>
    %65 = vector.shape_cast %64 : vector<1x4x4xf32> to vector<4x4xf32>
    %cst_38 = arith.constant dense<0.000000e+00> : vector<4x256xf32>
    %66 = tpu.matmul %65, %12, %cst_38 {dimension_numbers = #tpu.dot_dimension_numbers<[1], [1], [0], [0], [0, 0, 1, 0], [], []>} : vector<4x4xf32>, vector<256x4xf32>, vector<4x256xf32> -> vector<4x256xf32>
    %c9 = arith.constant 9 : index
    %c0_39 = arith.constant 0 : index
    %c0_40 = arith.constant 0 : index
    %67 = vector.load %arg3[%c9, %c0_39, %c0_40] : memref<16x4x4xf32, #tpu.memory_space<vmem>>, vector<1x4x4xf32>
    %68 = vector.shape_cast %67 : vector<1x4x4xf32> to vector<4x4xf32>
    %cst_41 = arith.constant dense<0.000000e+00> : vector<4x256xf32>
    %69 = tpu.matmul %68, %14, %cst_41 {dimension_numbers = #tpu.dot_dimension_numbers<[1], [1], [0], [0], [0, 0, 1, 0], [], []>} : vector<4x4xf32>, vector<256x4xf32>, vector<4x256xf32> -> vector<4x256xf32>
    %70 = arith.addf %66, %69 : vector<4x256xf32>
    %c10 = arith.constant 10 : index
    %c0_42 = arith.constant 0 : index
    %c0_43 = arith.constant 0 : index
    %71 = vector.load %arg3[%c10, %c0_42, %c0_43] : memref<16x4x4xf32, #tpu.memory_space<vmem>>, vector<1x4x4xf32>
    %72 = vector.shape_cast %71 : vector<1x4x4xf32> to vector<4x4xf32>
    %cst_44 = arith.constant dense<0.000000e+00> : vector<4x256xf32>
    %73 = tpu.matmul %72, %18, %cst_44 {dimension_numbers = #tpu.dot_dimension_numbers<[1], [1], [0], [0], [0, 0, 1, 0], [], []>} : vector<4x4xf32>, vector<256x4xf32>, vector<4x256xf32> -> vector<4x256xf32>
    %74 = arith.addf %70, %73 : vector<4x256xf32>
    %c11 = arith.constant 11 : index
    %c0_45 = arith.constant 0 : index
    %c0_46 = arith.constant 0 : index
    %75 = vector.load %arg3[%c11, %c0_45, %c0_46] : memref<16x4x4xf32, #tpu.memory_space<vmem>>, vector<1x4x4xf32>
    %76 = vector.shape_cast %75 : vector<1x4x4xf32> to vector<4x4xf32>
    %cst_47 = arith.constant dense<0.000000e+00> : vector<4x256xf32>
    %77 = tpu.matmul %76, %20, %cst_47 {dimension_numbers = #tpu.dot_dimension_numbers<[1], [1], [0], [0], [0, 0, 1, 0], [], []>} : vector<4x4xf32>, vector<256x4xf32>, vector<4x256xf32> -> vector<4x256xf32>
    %78 = arith.addf %74, %77 : vector<4x256xf32>
    %79 = vector.broadcast %23 : vector<4x1xf32> to vector<4x256xf32>
    %80 = arith.addf %78, %79 : vector<4x256xf32>
    %c0_48 = arith.constant 0 : index
    %c2_49 = arith.constant 2 : index
    %c0_50 = arith.constant 0 : index
    %c0_51 = arith.constant 0 : index
    %81 = vector.load %arg5[%c0_48, %c2_49, %c0_50, %c0_51] : memref<1x4x4x256xf32, #tpu.memory_space<vmem>>, vector<1x1x4x256xf32>
    %82 = vector.shape_cast %81 : vector<1x1x4x256xf32> to vector<4x256xf32>
    %83 = vector.shape_cast %80 : vector<4x256xf32> to vector<1x1x4x256xf32>
    tpu.vector_store %arg5[%c0_48, %c2_49, %c0_50, %c0_51], %83 {strides = array<i32>} : memref<1x4x4x256xf32, #tpu.memory_space<vmem>>, vector<1x1x4x256xf32>,
    %c12 = arith.constant 12 : index
    %c0_52 = arith.constant 0 : index
    %c0_53 = arith.constant 0 : index
    %84 = vector.load %arg3[%c12, %c0_52, %c0_53] : memref<16x4x4xf32, #tpu.memory_space<vmem>>, vector<1x4x4xf32>
    %85 = vector.shape_cast %84 : vector<1x4x4xf32> to vector<4x4xf32>
    %cst_54 = arith.constant dense<0.000000e+00> : vector<4x256xf32>
    %86 = tpu.matmul %85, %14, %cst_54 {dimension_numbers = #tpu.dot_dimension_numbers<[1], [1], [0], [0], [0, 0, 1, 0], [], []>} : vector<4x4xf32>, vector<256x4xf32>, vector<4x256xf32> -> vector<4x256xf32>
    %c13 = arith.constant 13 : index
    %c0_55 = arith.constant 0 : index
    %c0_56 = arith.constant 0 : index
    %87 = vector.load %arg3[%c13, %c0_55, %c0_56] : memref<16x4x4xf32, #tpu.memory_space<vmem>>, vector<1x4x4xf32>
    %88 = vector.shape_cast %87 : vector<1x4x4xf32> to vector<4x4xf32>
    %cst_57 = arith.constant dense<0.000000e+00> : vector<4x256xf32>
    %89 = tpu.matmul %88, %16, %cst_57 {dimension_numbers = #tpu.dot_dimension_numbers<[1], [1], [0], [0], [0, 0, 1, 0], [], []>} : vector<4x4xf32>, vector<256x4xf32>, vector<4x256xf32> -> vector<4x256xf32>
    %90 = arith.addf %86, %89 : vector<4x256xf32>
    %c14 = arith.constant 14 : index
    %c0_58 = arith.constant 0 : index
    %c0_59 = arith.constant 0 : index
    %91 = vector.load %arg3[%c14, %c0_58, %c0_59] : memref<16x4x4xf32, #tpu.memory_space<vmem>>, vector<1x4x4xf32>
    %92 = vector.shape_cast %91 : vector<1x4x4xf32> to vector<4x4xf32>
    %cst_60 = arith.constant dense<0.000000e+00> : vector<4x256xf32>
    %93 = tpu.matmul %92, %20, %cst_60 {dimension_numbers = #tpu.dot_dimension_numbers<[1], [1], [0], [0], [0, 0, 1, 0], [], []>} : vector<4x4xf32>, vector<256x4xf32>, vector<4x256xf32> -> vector<4x256xf32>
    %94 = arith.addf %90, %93 : vector<4x256xf32>
    %c15 = arith.constant 15 : index
    %c0_61 = arith.constant 0 : index
    %c0_62 = arith.constant 0 : index
    %95 = vector.load %arg3[%c15, %c0_61, %c0_62] : memref<16x4x4xf32, #tpu.memory_space<vmem>>, vector<1x4x4xf32>
    %96 = vector.shape_cast %95 : vector<1x4x4xf32> to vector<4x4xf32>
    %cst_63 = arith.constant dense<0.000000e+00> : vector<4x256xf32>
    %97 = tpu.matmul %96, %22, %cst_63 {dimension_numbers = #tpu.dot_dimension_numbers<[1], [1], [0], [0], [0, 0, 1, 0], [], []>} : vector<4x4xf32>, vector<256x4xf32>, vector<4x256xf32> -> vector<4x256xf32>
    %98 = arith.addf %94, %97 : vector<4x256xf32>
    %99 = vector.broadcast %23 : vector<4x1xf32> to vector<4x256xf32>
    %100 = arith.addf %98, %99 : vector<4x256xf32>
    %c0_64 = arith.constant 0 : index
    %c3_65 = arith.constant 3 : index
    %c0_66 = arith.constant 0 : index
    %c0_67 = arith.constant 0 : index
    %101 = vector.load %arg5[%c0_64, %c3_65, %c0_66, %c0_67] : memref<1x4x4x256xf32, #tpu.memory_space<vmem>>, vector<1x1x4x256xf32>
    %102 = vector.shape_cast %101 : vector<1x1x4x256xf32> to vector<4x256xf32>
    %103 = vector.shape_cast %100 : vector<4x256xf32> to vector<1x1x4x256xf32>
    tpu.vector_store %arg5[%c0_64, %c3_65, %c0_66, %c0_67], %103 {strides = array<i32>} : memref<1x4x4x256xf32, #tpu.memory_space<vmem>>, vector<1x1x4x256xf32>,
    return
  }
  func.func @transform_0(%arg0: i32, %arg1: i32) -> (i32, i32, i32, i32) {
    %c0_i32 = arith.constant 0 : i32
    %c0_i32_0 = arith.constant 0 : i32
    %c0_i32_1 = arith.constant 0 : i32
    %c0_i32_2 = arith.constant 0 : i32
    return %arg0, %c0_i32, %c0_i32_0, %c0_i32_1 : i32, i32, i32, i32
  }
  func.func @transform_1(%arg0: i32, %arg1: i32) -> (i32, i32, i32) {
    %c0_i32 = arith.constant 0 : i32
    %c0_i32_0 = arith.constant 0 : i32
    %c0_i32_1 = arith.constant 0 : i32
    %c0_i32_2 = arith.constant 0 : i32
    return %c0_i32, %c0_i32_0, %c0_i32_1 : i32, i32, i32
  }
  func.func @transform_2(%arg0: i32, %arg1: i32) -> (i32, i32) {
    %c0_i32 = arith.constant 0 : i32
    %c0_i32_0 = arith.constant 0 : i32
    %c0_i32_1 = arith.constant 0 : i32
    return %c0_i32, %c0_i32_0 : i32, i32
  }
  func.func @transform_3(%arg0: i32, %arg1: i32) -> (i32, i32, i32, i32) {
    %c0_i32 = arith.constant 0 : i32
    %c0_i32_0 = arith.constant 0 : i32
    %c0_i32_1 = arith.constant 0 : i32
    return %arg0, %c0_i32, %c0_i32_0, %arg1 : i32, i32, i32, i32
  }
}

</mosaic_0001>

<llo_original>
// kernel: tpu_custom_call.1
$region0: #{tpu_custom_call.1}
  #allocation0 [shape = 'u32[]', space=smem, size = 0x4, offset = 0x4, fixed_abs, tag = 'smem constant byte address 0x4 - core index']
  #allocation1 [shape = 'u32[72,128]{1,0:T(1,128)}', space=vmem, size = 0x9000, scoped, tag = 'internal scratch']
  %s0 = inlined_call_operand.vmem [shape: f32[2,18,18,4], index: 0, kind: input, shape index: {}]
  %s1 = inlined_call_operand.vmem [shape: f32[16,4,4], index: 1, kind: input, shape index: {}]
  %s2 = inlined_call_operand.vmem [shape: f32[4,1], index: 2, kind: input, shape index: {}]
  %s3 = inlined_call_operand.hbm [shape: f32[2,4,4,256], index: 3, kind: output, shape index: {}]
  %s4 = sld [smem:[#allocation0]]
  $region45: #{tpu_custom_call.1} parent=0
    _
  %s6 = ssub.s32 1, %s4
  %s7 = scalar_select 0, %s6, %s4
  $region1: #{tpu_custom_call.1} parent=0
    #allocation2 [shape = 'u8[32768]{0}', space=vmem, size = 0x8000, scoped, tag = 'output window, operand 0']
    #allocation3 [shape = 's32[2]{0}', space=sflag, size = 0x8, scoped, tag = 'scoped memory for tpu_custom_call.1']
    %8 = vsyncpa [#allocation3], 0
    %s9 = scalar_lea.sflag [#allocation3], 1
    %10 = vsyncpa %s9, 0
    loop: start=0, step=1, limit=4
    $region2: #{tpu_custom_call.1} parent=1 // loop_pre_header
      _
    $region3: #{tpu_custom_call.1} parent=1 // loop_header
      %s12 = sphi 0, %s16
      %p13 = scmp.ge.s32.totalorder %s12, 4
      %s19 = sphi 0, %s31
      %s20 = sphi 0, %s27
      %s21 = sphi 0, %s19
      %s22 = sphi 0, %s20
      %s23 = sphi 0, %s21
      %s24 = sphi 0, %s22
      %s34 = sphi 0, %s36
      %s37 = sphi 0, %s34
      %s38 = sphi 0, %s37
      %s54 = sphi 0, %s38
      %s58 = sphi 0, %s58
      %s60 = sphi 0, %s58
      %s61 = sphi 0, %s60
      %s75 = sphi 0, %s61
      %s79 = sphi 0, %s79
      %s81 = sphi 0, %s79
      %s82 = sphi 0, %s81
      %s96 = sphi 0, %s82
      %s104 = sphi 0, %s106
      %s107 = sphi 0, %s104
      %s108 = sphi 0, %s107
      %s124 = sphi 0, %s108
    $region4: #{tpu_custom_call.1} parent=1 // loop_header_branch
      %15 = sbr.rel (%p13) target = $region8
    $region5: #{tpu_custom_call.1} parent=1 // loop_body
      %s17 = ssub.s32 %s12, 1
      %s18 = ssub.s32 %s12, 2
      %s25 = sadd.s32 1, %s20
      %p26 = scmp.ge.s32.totalorder %s25, 1
      %s27 = scalar_select %p26, 0, %s25
      %s28 = sadd.s32 1, %s19
      %s29 = scalar_select %p26, %s28, %s19
      %p30 = scmp.ge.s32.totalorder %s29, 2
      %s31 = scalar_select %p30, 0, %s29
      %s32 = ssub.s32 %s19, %s31
      %p33 = scmp.eq.s32.totalorder %s32, 0
      %s35 = sadd.s32 %s34, 1
      %s36 = scalar_select %p33, %s34, %s35
      %p39 = pneg %p33
      %p40 = scmp.eq.s32.totalorder %s12, 1
      %p41 = por %p39, %p40
      %p42 = scmp.ne.s32.totalorder %s34, %s37
      %p43 = scmp.eq.s32.totalorder %s12, 0
      %p44 = por %p42, %p43
      %p45 = scmp.ne.s32.totalorder %s34, %s37
      %p46 = scmp.eq.s32.totalorder %s17, 1
      %p47 = por %p45, %p46
      %p48 = scmp.ne.s32.totalorder %s37, %s38
      %p49 = scmp.eq.s32.totalorder %s17, 0
      %p50 = por %p48, %p49
      %p51 = scmp.ne.s32.totalorder %s37, %s38
      %p52 = scmp.eq.s32.totalorder %s18, 1
      %p53 = por %p51, %p52
      %p55 = scmp.ne.s32.totalorder %s38, %s54
      %p56 = scmp.eq.s32.totalorder %s18, 0
      %p57 = por %p55, %p56
      %s59 = sadd.s32 %s58, 1
      %p62 = scmp.eq.s32.totalorder %s12, 1
      %p63 = scmp.ne.s32.totalorder %s58, %s60
      %p64 = scmp.eq.s32.totalorder %s12, 0
      %p65 = por %p63, %p64
      %p66 = scmp.ne.s32.totalorder %s58, %s60
      %p67 = scmp.eq.s32.totalorder %s17, 1
      %p68 = por %p66, %p67
      %p69 = scmp.ne.s32.totalorder %s60, %s61
      %p70 = scmp.eq.s32.totalorder %s17, 0
      %p71 = por %p69, %p70
      %p72 = scmp.ne.s32.totalorder %s60, %s61
      %p73 = scmp.eq.s32.totalorder %s18, 1
      %p74 = por %p72, %p73
      %p76 = scmp.ne.s32.totalorder %s61, %s75
      %p77 = scmp.eq.s32.totalorder %s18, 0
      %p78 = por %p76, %p77
      %s80 = sadd.s32 %s79, 1
      %p83 = scmp.eq.s32.totalorder %s12, 1
      %p84 = scmp.ne.s32.totalorder %s79, %s81
      %p85 = scmp.eq.s32.totalorder %s12, 0
      %p86 = por %p84, %p85
      %p87 = scmp.ne.s32.totalorder %s79, %s81
      %p88 = scmp.eq.s32.totalorder %s17, 1
      %p89 = por %p87, %p88
      %p90 = scmp.ne.s32.totalorder %s81, %s82
      %p91 = scmp.eq.s32.totalorder %s17, 0
      %p92 = por %p90, %p91
      %p93 = scmp.ne.s32.totalorder %s81, %s82
      %p94 = scmp.eq.s32.totalorder %s18, 1
      %p95 = por %p93, %p94
      %p97 = scmp.ne.s32.totalorder %s82, %s96
      %p98 = scmp.eq.s32.totalorder %s18, 0
      %p99 = por %p97, %p98
      %s100 = ssub.s32 %s19, %s31
      %s101 = ssub.s32 %s20, %s27
      %s102 = sor.u32 %s100, %s101
      %p103 = scmp.eq.s32.totalorder %s102, 0
      %s105 = sadd.s32 %s104, 1
      %s106 = scalar_select %p103, %s104, %s105
      %p109 = pneg %p103
      %p110 = scmp.eq.s32.totalorder %s12, 1
      %p111 = por %p109, %p110
      %p112 = scmp.ne.s32.totalorder %s104, %s107
      %p113 = scmp.eq.s32.totalorder %s12, 0
      %p114 = por %p112, %p113
      %p115 = scmp.ne.s32.totalorder %s104, %s107
      %p116 = scmp.eq.s32.totalorder %s17, 1
      %p117 = por %p115, %p116
      %p118 = scmp.ne.s32.totalorder %s107, %s108
      %p119 = scmp.eq.s32.totalorder %s17, 0
      %p120 = por %p118, %p119
      %p121 = scmp.ne.s32.totalorder %s107, %s108
      %p122 = scmp.eq.s32.totalorder %s18, 1
      %p123 = por %p121, %p122
      %p125 = scmp.ne.s32.totalorder %s108, %s124
      %p126 = scmp.eq.s32.totalorder %s18, 0
      %p127 = por %p125, %p126
      %p128 = scmp.le.s32.totalorder 1, %s12
      %p129 = scmp.lt.s32.totalorder %s12, 3
      %p130 = pnand %p128, %p129
      %p131 = pneg %p130
      // Predicated region
      $region9: #{tpu_custom_call.1} parent=5 // pred_check
        _
      $region10: #{tpu_custom_call.1} parent=5 // pred_check_branch
        %133 = sbr.rel (%p130) target = $region12
      $region11: #{tpu_custom_call.1} parent=5 // pred_region
        %s134 = ssub.s32 %s12, 1
        // Predicated region
        $region13: #{tpu_custom_call.1} parent=11 // pred_check
          %p135 = pneg %p71
        $region14: #{tpu_custom_call.1} parent=11 // pred_check_branch
          %137 = sbr.rel (%p135) target = $region16
        $region15: #{tpu_custom_call.1} parent=11 // pred_region
          _
        $region16: #{tpu_custom_call.1} parent=11 // pred_fallthru
          _
        // Predicated region
        $region17: #{tpu_custom_call.1} parent=11 // pred_check
          %p138 = pneg %p92
        $region18: #{tpu_custom_call.1} parent=11 // pred_check_branch
          %140 = sbr.rel (%p138) target = $region20
        $region19: #{tpu_custom_call.1} parent=11 // pred_region
          _
        $region20: #{tpu_custom_call.1} parent=11 // pred_fallthru
          _
      $region12: #{tpu_custom_call.1} parent=5 // pred_fallthru
        _
      %p141 = scmp.lt.s32.totalorder %s12, 2
      // Predicated region
      $region21: #{tpu_custom_call.1} parent=5 // pred_check
        %p142 = pneg %p141
      $region22: #{tpu_custom_call.1} parent=5 // pred_check_branch
        %144 = sbr.rel (%p142) target = $region24
      $region23: #{tpu_custom_call.1} parent=5 // pred_region
        // Predicated region
        $region25: #{tpu_custom_call.1} parent=23 // pred_check
          %p145 = pneg %p44
        $region26: #{tpu_custom_call.1} parent=23 // pred_check_branch
          %147 = sbr.rel (%p145) target = $region28
        $region27: #{tpu_custom_call.1} parent=23 // pred_region
          %p148 = scmp.lt.s32.totalorder %s19, 1
          %s149 = scalar_select %p148, %s19, 1
          %s150 = smul.addr %s149, 54
          %s151 = smul.addr %s150, 8
          %s152 = scalar_lea.vmem %s0, %s151
        $region28: #{tpu_custom_call.1} parent=23 // pred_fallthru
          _
      $region24: #{tpu_custom_call.1} parent=5 // pred_fallthru
        _
      %p153 = scmp.le.s32.totalorder 1, %s12
      %p154 = scmp.lt.s32.totalorder %s12, 3
      %p155 = pnand %p153, %p154
      %p156 = pneg %p155
      // Predicated region
      $region29: #{tpu_custom_call.1} parent=5 // pred_check
        _
      $region30: #{tpu_custom_call.1} parent=5 // pred_check_branch
        %158 = sbr.rel (%p155) target = $region32
      $region31: #{tpu_custom_call.1} parent=5 // pred_region
        %s159 = ssub.s32 %s12, 1
        %p160 = scmp.lt.s32.totalorder %s21, 1
        %s161 = scalar_select %p160, %s21, 1
        %s162 = smul.addr %s161, 54
        %s163 = smul.addr %s162, 8
        %s164 = scalar_lea.vmem %s0, %s163
        %p165 = pneg %p50
        %p166 = pneg %p47
        %p167 = pneg %p71
        %p168 = pneg %p68
        %p169 = pneg %p92
        %p170 = pneg %p89
        %p171 = pneg %p120
        %p172 = pneg %p117
        %s173 = sand.u32 %s107, 1
        %s174 = scalar_lea.sflag [#allocation3], %s173
        %s175 = sand.u32 %s107, 1
        %s176 = smul.addr %s175, 32
        %s177 = scalar_lea.vmem [#allocation2], %s176
        %p178 = scmp.lt.s32.totalorder %s21, 1
        %s179 = scalar_select %p178, %s21, 1
        %s180 = smul.addr %s179, 54
        %s181 = smul.addr %s180, 8
        %s182 = scalar_lea.vmem %s0, %s181
        %s183 = smul.u32 2, %s22
        %s184 = smul.u32 %s22, 16
        %s185 = smul.u32 %s184, 24
        %s186 = scalar_lea.vmem %s182, %s185
        %v187 = vld [vmem:[%s186] sm:$0xff]
        %v188 = vld [vmem:[%s186 + $0x8] sm:$0xff]
        %v189 = vld [vmem:[%s186 + $0x10] sm:$0x3]
        %v190 = vld [vmem:[%s186 + $0x18] sm:$0xff]
        %v191 = vld [vmem:[%s186 + $0x20] sm:$0xff]
        %v192 = vld [vmem:[%s186 + $0x28] sm:$0x3]
        %v193 = vld [vmem:[%s186 + $0x30] sm:$0xff]
        %v194 = vld [vmem:[%s186 + $0x38] sm:$0xff]
        %v195 = vld [vmem:[%s186 + $0x40] sm:$0x3]
        %v196 = vld [vmem:[%s186 + $0x48] sm:$0xff]
        %v197 = vld [vmem:[%s186 + $0x50] sm:$0xff]
        %v198 = vld [vmem:[%s186 + $0x58] sm:$0x3]
        %v199 = vld [vmem:[%s186 + $0x60] sm:$0xff]
        %v200 = vld [vmem:[%s186 + $0x68] sm:$0xff]
        %v201 = vld [vmem:[%s186 + $0x70] sm:$0x3]
        %v202 = vld [vmem:[%s186 + $0x78] sm:$0xff]
        %v203 = vld [vmem:[%s186 + $0x80] sm:$0xff]
        %v204 = vld [vmem:[%s186 + $0x88] sm:$0x3]
        %v205 = vld [vmem:[%s186 + $0x90] sm:$0xff]
        %v206 = vld [vmem:[%s186 + $0x98] sm:$0xff]
        %v207 = vld [vmem:[%s186 + $0xa0] sm:$0x3]
        %v208 = vld [vmem:[%s186 + $0xa8] sm:$0xff]
        %v209 = vld [vmem:[%s186 + $0xb0] sm:$0xff]
        %v210 = vld [vmem:[%s186 + $0xb8] sm:$0x3]
        %v211 = vld [vmem:[%s186 + $0xc0] sm:$0xff]
        %v212 = vld [vmem:[%s186 + $0xc8] sm:$0xff]
        %v213 = vld [vmem:[%s186 + $0xd0] sm:$0x3]
        %v214 = vld [vmem:[%s186 + $0xd8] sm:$0xff]
        %v215 = vld [vmem:[%s186 + $0xe0] sm:$0xff]
        %v216 = vld [vmem:[%s186 + $0xe8] sm:$0x3]
        %v217 = vld [vmem:[%s186 + $0xf0] sm:$0xff]
        %v218 = vld [vmem:[%s186 + $0xf8] sm:$0xff]
        %v219 = vld [vmem:[%s186 + $0x100] sm:$0x3]
        %v220 = vld [vmem:[%s186 + $0x108] sm:$0xff]
        %v221 = vld [vmem:[%s186 + $0x110] sm:$0xff]
        %v222 = vld [vmem:[%s186 + $0x118] sm:$0x3]
        %v223 = vld [vmem:[%s186 + $0x120] sm:$0xff]
        %v224 = vld [vmem:[%s186 + $0x128] sm:$0xff]
        %v225 = vld [vmem:[%s186 + $0x130] sm:$0x3]
        %v226 = vld [vmem:[%s186 + $0x138] sm:$0xff]
        %v227 = vld [vmem:[%s186 + $0x140] sm:$0xff]
        %v228 = vld [vmem:[%s186 + $0x148] sm:$0x3]
        %v229 = vld [vmem:[%s186 + $0x150] sm:$0xff]
        %v230 = vld [vmem:[%s186 + $0x158] sm:$0xff]
        %v231 = vld [vmem:[%s186 + $0x160] sm:$0x3]
        %v232 = vld [vmem:[%s186 + $0x168] sm:$0xff]
        %v233 = vld [vmem:[%s186 + $0x170] sm:$0xff]
        %v234 = vld [vmem:[%s186 + $0x178] sm:$0x3]
        %v235 = vld [vmem:[%s186 + $0x180] sm:$0xff]
        %v236 = vld [vmem:[%s186 + $0x188] sm:$0xff]
        %v237 = vld [vmem:[%s186 + $0x190] sm:$0x3]
        %v238 = vld [vmem:[%s186 + $0x198] sm:$0xff]
        %v239 = vld [vmem:[%s186 + $0x1a0] sm:$0xff]
        %v240 = vld [vmem:[%s186 + $0x1a8] sm:$0x3]
        %vm289 = vcmask 1046528
        %v290 = vrot.slane %v187, 1
        %v291 = vrot.slane %v188, 1
        %v292 = vsel %vm289, %v290, %v291
        %v293 = vrot.slane %v189, 1
        %v294 = vsel %vm289, %v291, %v293
        %v295 = vrot.slane %v190, 1
        %v296 = vrot.slane %v191, 1
        %v297 = vsel %vm289, %v295, %v296
        %v298 = vrot.slane %v192, 1
        %v299 = vsel %vm289, %v296, %v298
        %v300 = vrot.slane %v193, 1
        %v301 = vrot.slane %v194, 1
        %v302 = vsel %vm289, %v300, %v301
        %v303 = vrot.slane %v195, 1
        %v304 = vsel %vm289, %v301, %v303
        %v305 = vrot.slane %v196, 1
        %v306 = vrot.slane %v197, 1
        %v307 = vsel %vm289, %v305, %v306
        %v308 = vrot.slane %v198, 1
        %v309 = vsel %vm289, %v306, %v308
        %v310 = vrot.slane %v199, 1
        %v311 = vrot.slane %v200, 1
        %v312 = vsel %vm289, %v310, %v311
        %v313 = vrot.slane %v201, 1
        %v314 = vsel %vm289, %v311, %v313
        %v315 = vrot.slane %v202, 1
        %v316 = vrot.slane %v203, 1
        %v317 = vsel %vm289, %v315, %v316
        %v318 = vrot.slane %v204, 1
        %v319 = vsel %vm289, %v316, %v318
        %v320 = vrot.slane %v205, 1
        %v321 = vrot.slane %v206, 1
        %v322 = vsel %vm289, %v320, %v321
        %v323 = vrot.slane %v207, 1
        %v324 = vsel %vm289, %v321, %v323
        %v325 = vrot.slane %v208, 1
        %v326 = vrot.slane %v209, 1
        %v327 = vsel %vm289, %v325, %v326
        %v328 = vrot.slane %v210, 1
        %v329 = vsel %vm289, %v326, %v328
        %v330 = vrot.slane %v211, 1
        %v331 = vrot.slane %v212, 1
        %v332 = vsel %vm289, %v330, %v331
        %v333 = vrot.slane %v213, 1
        %v334 = vsel %vm289, %v331, %v333
        %v335 = vrot.slane %v214, 1
        %v336 = vrot.slane %v215, 1
        %v337 = vsel %vm289, %v335, %v336
        %v338 = vrot.slane %v216, 1
        %v339 = vsel %vm289, %v336, %v338
        %v340 = vrot.slane %v217, 1
        %v341 = vrot.slane %v218, 1
        %v342 = vsel %vm289, %v340, %v341
        %v343 = vrot.slane %v219, 1
        %v344 = vsel %vm289, %v341, %v343
        %v345 = vrot.slane %v220, 1
        %v346 = vrot.slane %v221, 1
        %v347 = vsel %vm289, %v345, %v346
        %v348 = vrot.slane %v222, 1
        %v349 = vsel %vm289, %v346, %v348
        %v350 = vrot.slane %v223, 1
        %v351 = vrot.slane %v224, 1
        %v352 = vsel %vm289, %v350, %v351
        %v353 = vrot.slane %v225, 1
        %v354 = vsel %vm289, %v351, %v353
        %v355 = vrot.slane %v226, 1
        %v356 = vrot.slane %v227, 1
        %v357 = vsel %vm289, %v355, %v356
        %v358 = vrot.slane %v228, 1
        %v359 = vsel %vm289, %v356, %v358
        %v360 = vrot.slane %v229, 1
        %v361 = vrot.slane %v230, 1
        %v362 = vsel %vm289, %v360, %v361
        %v363 = vrot.slane %v231, 1
        %v364 = vsel %vm289, %v361, %v363
        %v365 = vrot.slane %v232, 1
        %v366 = vrot.slane %v233, 1
        %v367 = vsel %vm289, %v365, %v366
        %v368 = vrot.slane %v234, 1
        %v369 = vsel %vm289, %v366, %v368
        %vm370 = vcmask 1045504
        %v371 = vrot.slane %v187, 2
        %v372 = vrot.slane %v188, 2
        %v373 = vsel %vm370, %v371, %v372
        %v374 = vrot.slane %v189, 2
        %v375 = vsel %vm370, %v372, %v374
        %v376 = vrot.slane %v190, 2
        %v377 = vrot.slane %v191, 2
        %v378 = vsel %vm370, %v376, %v377
        %v379 = vrot.slane %v192, 2
        %v380 = vsel %vm370, %v377, %v379
        %v381 = vrot.slane %v193, 2
        %v382 = vrot.slane %v194, 2
        %v383 = vsel %vm370, %v381, %v382
        %v384 = vrot.slane %v195, 2
        %v385 = vsel %vm370, %v382, %v384
        %v386 = vrot.slane %v196, 2
        %v387 = vrot.slane %v197, 2
        %v388 = vsel %vm370, %v386, %v387
        %v389 = vrot.slane %v198, 2
        %v390 = vsel %vm370, %v387, %v389
        %v391 = vrot.slane %v199, 2
        %v392 = vrot.slane %v200, 2
        %v393 = vsel %vm370, %v391, %v392
        %v394 = vrot.slane %v201, 2
        %v395 = vsel %vm370, %v392, %v394
        %v396 = vrot.slane %v202, 2
        %v397 = vrot.slane %v203, 2
        %v398 = vsel %vm370, %v396, %v397
        %v399 = vrot.slane %v204, 2
        %v400 = vsel %vm370, %v397, %v399
        %v401 = vrot.slane %v205, 2
        %v402 = vrot.slane %v206, 2
        %v403 = vsel %vm370, %v401, %v402
        %v404 = vrot.slane %v207, 2
        %v405 = vsel %vm370, %v402, %v404
        %v406 = vrot.slane %v208, 2
        %v407 = vrot.slane %v209, 2
        %v408 = vsel %vm370, %v406, %v407
        %v409 = vrot.slane %v210, 2
        %v410 = vsel %vm370, %v407, %v409
        %v411 = vrot.slane %v211, 2
        %v412 = vrot.slane %v212, 2
        %v413 = vsel %vm370, %v411, %v412
        %v414 = vrot.slane %v213, 2
        %v415 = vsel %vm370, %v412, %v414
        %v416 = vrot.slane %v214, 2
        %v417 = vrot.slane %v215, 2
        %v418 = vsel %vm370, %v416, %v417
        %v419 = vrot.slane %v216, 2
        %v420 = vsel %vm370, %v417, %v419
        %v421 = vrot.slane %v217, 2
        %v422 = vrot.slane %v218, 2
        %v423 = vsel %vm370, %v421, %v422
        %v424 = vrot.slane %v219, 2
        %v425 = vsel %vm370, %v422, %v424
        %v426 = vrot.slane %v220, 2
        %v427 = vrot.slane %v221, 2
        %v428 = vsel %vm370, %v426, %v427
        %v429 = vrot.slane %v222, 2
        %v430 = vsel %vm370, %v427, %v429
        %v431 = vrot.slane %v223, 2
        %v432 = vrot.slane %v224, 2
        %v433 = vsel %vm370, %v431, %v432
        %v434 = vrot.slane %v225, 2
        %v435 = vsel %vm370, %v432, %v434
        %v436 = vrot.slane %v226, 2
        %v437 = vrot.slane %v227, 2
        %v438 = vsel %vm370, %v436, %v437
        %v439 = vrot.slane %v228, 2
        %v440 = vsel %vm370, %v437, %v439
        %v441 = vrot.slane %v229, 2
        %v442 = vrot.slane %v230, 2
        %v443 = vsel %vm370, %v441, %v442
        %v444 = vrot.slane %v231, 2
        %v445 = vsel %vm370, %v442, %v444
        %v446 = vrot.slane %v232, 2
        %v447 = vrot.slane %v233, 2
        %v448 = vsel %vm370, %v446, %v447
        %v449 = vrot.slane %v234, 2
        %v450 = vsel %vm370, %v447, %v449
        %v454 = vrot.slane %v235, 1
        %v455 = vrot.slane %v236, 1
        %v456 = vsel %vm289, %v454, %v455
        %v457 = vrot.slane %v237, 1
        %v458 = vsel %vm289, %v455, %v457
        %v459 = vrot.slane %v235, 2
        %v460 = vrot.slane %v236, 2
        %v461 = vsel %vm370, %v459, %v460
        %v462 = vrot.slane %v237, 2
        %v463 = vsel %vm370, %v460, %v462
        %v467 = vrot.slane %v238, 1
        %v468 = vrot.slane %v239, 1
        %v469 = vsel %vm289, %v467, %v468
        %v470 = vrot.slane %v240, 1
        %v471 = vsel %vm289, %v468, %v470
        %v472 = vrot.slane %v238, 2
        %v473 = vrot.slane %v239, 2
        %v474 = vsel %vm370, %v472, %v473
        %v475 = vrot.slane %v240, 2
        %v476 = vsel %vm370, %v473, %v475
        %v477 = vld [vmem:[%s2] sm:$0xf]
        %v478 = vld [vmem:[%s1] sm:$0xf]
        %s479 = scalar_lea.vmem %s1, 4
        %v480 = vld [vmem:[%s479] sm:$0xf]
        %vm481 = vcmask 31744
        %v483 = vsel %vm481, %v480, 0
        %v485 = vsel %vm481, %v292, 0
        %v487 = vsel %vm481, %v294, 0
        %v489 = vsel %vm481, %v297, 0
        %v491 = vsel %vm481, %v299, 0
        %v493 = vsel %vm481, %v302, 0
        %v495 = vsel %vm481, %v304, 0
        %v497 = vsel %vm481, %v307, 0
        %v499 = vsel %vm481, %v309, 0
        %v501 = vsel %vm481, %v312, 0
        %v503 = vsel %vm481, %v314, 0
        %v505 = vsel %vm481, %v317, 0
        %v507 = vsel %vm481, %v319, 0
        %v509 = vsel %vm481, %v322, 0
        %v511 = vsel %vm481, %v324, 0
        %v513 = vsel %vm481, %v327, 0
        %v515 = vsel %vm481, %v329, 0
        %v517 = vsel %vm481, %v332, 0
        %v519 = vsel %vm481, %v334, 0
        %v521 = vsel %vm481, %v337, 0
        %v523 = vsel %vm481, %v339, 0
        %v525 = vsel %vm481, %v342, 0
        %v527 = vsel %vm481, %v344, 0
        %v529 = vsel %vm481, %v347, 0
        %v531 = vsel %vm481, %v349, 0
        %v533 = vsel %vm481, %v352, 0
        %v535 = vsel %vm481, %v354, 0
        %v537 = vsel %vm481, %v357, 0
        %v539 = vsel %vm481, %v359, 0
        %v541 = vsel %vm481, %v362, 0
        %v543 = vsel %vm481, %v364, 0
        %v545 = vsel %vm481, %v367, 0
        %v547 = vsel %vm481, %v369, 0
        %549 = vmatpush.xpose.msra.mxu0 %v515
        %550 = vmatpush.xpose.msra.mxu0 %v513
        %551 = vmatpush.xpose.msra.mxu0 %v511
        %552 = vmatpush.xpose.msra.mxu0 %v509
        %553 = vmatpush.xpose.msra.mxu0 %v507
        %554 = vmatpush.xpose.msra.mxu0 %v505
        %555 = vmatpush.xpose.msra.mxu0 %v503
        %556 = vmatpush.xpose.msra.mxu0 %v501
        %557 = vmatpush.xpose.msra.mxu0 %v499
        %558 = vmatpush.xpose.msra.mxu0 %v497
        %559 = vmatpush.xpose.msra.mxu0 %v495
        %560 = vmatpush.xpose.msra.mxu0 %v493
        %561 = vmatpush.xpose.msra.mxu0 %v491
        %562 = vmatpush.xpose.msra.mxu0 %v489
        %563 = vmatpush.xpose.msra.mxu0 %v487
        %564 = vmatpush.xpose.msra.mxu0 %v485
        %565 = vmatmul.f32.gmra.mxu0 %v483
        %v566 = vpop.f32.mrf.mxu0
        %v567 = vadd.f32 0.0, %v566
        %568 = vdwg.mxu0
        %569 = vmatpush.xpose.msra.mxu0 %v547
        %570 = vmatpush.xpose.msra.mxu0 %v545
        %571 = vmatpush.xpose.msra.mxu0 %v543
        %572 = vmatpush.xpose.msra.mxu0 %v541
        %573 = vmatpush.xpose.msra.mxu0 %v539
        %574 = vmatpush.xpose.msra.mxu0 %v537
        %575 = vmatpush.xpose.msra.mxu0 %v535
        %576 = vmatpush.xpose.msra.mxu0 %v533
        %577 = vmatpush.xpose.msra.mxu0 %v531
        %578 = vmatpush.xpose.msra.mxu0 %v529
        %579 = vmatpush.xpose.msra.mxu0 %v527
        %580 = vmatpush.xpose.msra.mxu0 %v525
        %581 = vmatpush.xpose.msra.mxu0 %v523
        %582 = vmatpush.xpose.msra.mxu0 %v521
        %583 = vmatpush.xpose.msra.mxu0 %v519
        %584 = vmatpush.xpose.msra.mxu0 %v517
        %585 = vmatmul.f32.gmra.mxu0 %v483
        %v586 = vpop.f32.mrf.mxu0
        %v587 = vadd.f32 0.0, %v586
        %588 = vdwg.mxu0
        %v590 = vsel %vm481, %v478, 0
        %v592 = vsel %vm481, %v187, 0
        %v594 = vsel %vm481, %v188, 0
        %v596 = vsel %vm481, %v190, 0
        %v598 = vsel %vm481, %v191, 0
        %v600 = vsel %vm481, %v193, 0
        %v602 = vsel %vm481, %v194, 0
        %v604 = vsel %vm481, %v196, 0
        %v606 = vsel %vm481, %v197, 0
        %v608 = vsel %vm481, %v199, 0
        %v610 = vsel %vm481, %v200, 0
        %v612 = vsel %vm481, %v202, 0
        %v614 = vsel %vm481, %v203, 0
        %v616 = vsel %vm481, %v205, 0
        %v618 = vsel %vm481, %v206, 0
        %v620 = vsel %vm481, %v208, 0
        %v622 = vsel %vm481, %v209, 0
        %v624 = vsel %vm481, %v211, 0
        %v626 = vsel %vm481, %v212, 0
        %v628 = vsel %vm481, %v214, 0
        %v630 = vsel %vm481, %v215, 0
        %v632 = vsel %vm481, %v217, 0
        %v634 = vsel %vm481, %v218, 0
        %v636 = vsel %vm481, %v220, 0
        %v638 = vsel %vm481, %v221, 0
        %v640 = vsel %vm481, %v223, 0
        %v642 = vsel %vm481, %v224, 0
        %v644 = vsel %vm481, %v226, 0
        %v646 = vsel %vm481, %v227, 0
        %v648 = vsel %vm481, %v229, 0
        %v650 = vsel %vm481, %v230, 0
        %v652 = vsel %vm481, %v232, 0
        %v654 = vsel %vm481, %v233, 0
        %656 = vmatpush.xpose.msra.mxu0 %v622
        %657 = vmatpush.xpose.msra.mxu0 %v620
        %658 = vmatpush.xpose.msra.mxu0 %v618
        %659 = vmatpush.xpose.msra.mxu0 %v616
        %660 = vmatpush.xpose.msra.mxu0 %v614
        %661 = vmatpush.xpose.msra.mxu0 %v612
        %662 = vmatpush.xpose.msra.mxu0 %v610
        %663 = vmatpush.xpose.msra.mxu0 %v608
        %664 = vmatpush.xpose.msra.mxu0 %v606
        %665 = vmatpush.xpose.msra.mxu0 %v604
        %666 = vmatpush.xpose.msra.mxu0 %v602
        %667 = vmatpush.xpose.msra.mxu0 %v600
        %668 = vmatpush.xpose.msra.mxu0 %v598
        %669 = vmatpush.xpose.msra.mxu0 %v596
        %670 = vmatpush.xpose.msra.mxu0 %v594
        %671 = vmatpush.xpose.msra.mxu0 %v592
        %672 = vmatmul.f32.gmra.mxu0 %v590
        %v673 = vpop.f32.mrf.mxu0
        %v674 = vadd.f32 %v567, %v673
        %675 = vdwg.mxu0
        %676 = vmatpush.xpose.msra.mxu0 %v654
        %677 = vmatpush.xpose.msra.mxu0 %v652
        %678 = vmatpush.xpose.msra.mxu0 %v650
        %679 = vmatpush.xpose.msra.mxu0 %v648
        %680 = vmatpush.xpose.msra.mxu0 %v646
        %681 = vmatpush.xpose.msra.mxu0 %v644
        %682 = vmatpush.xpose.msra.mxu0 %v642
        %683 = vmatpush.xpose.msra.mxu0 %v640
        %684 = vmatpush.xpose.msra.mxu0 %v638
        %685 = vmatpush.xpose.msra.mxu0 %v636
        %686 = vmatpush.xpose.msra.mxu0 %v634
        %687 = vmatpush.xpose.msra.mxu0 %v632
        %688 = vmatpush.xpose.msra.mxu0 %v630
        %689 = vmatpush.xpose.msra.mxu0 %v628
        %690 = vmatpush.xpose.msra.mxu0 %v626
        %691 = vmatpush.xpose.msra.mxu0 %v624
        %692 = vmatmul.f32.gmra.mxu0 %v590
        %v693 = vpop.f32.mrf.mxu0
        %v694 = vadd.f32 %v587, %v693
        %695 = vdwg.mxu0
        %s696 = scalar_lea.vmem %s1, 8
        %v697 = vld [vmem:[%s696] sm:$0xf]
        %v699 = vsel %vm481, %v697, 0
        %v701 = vsel %vm481, %v235, 0
        %v703 = vsel %vm481, %v236, 0
        %705 = vmatpush.xpose.msra.mxu0 %v626
        %706 = vmatpush.xpose.msra.mxu0 %v624
        %707 = vmatpush.xpose.msra.mxu0 %v622
        %708 = vmatpush.xpose.msra.mxu0 %v620
        %709 = vmatpush.xpose.msra.mxu0 %v618
        %710 = vmatpush.xpose.msra.mxu0 %v616
        %711 = vmatpush.xpose.msra.mxu0 %v614
        %712 = vmatpush.xpose.msra.mxu0 %v612
        %713 = vmatpush.xpose.msra.mxu0 %v610
        %714 = vmatpush.xpose.msra.mxu0 %v608
        %715 = vmatpush.xpose.msra.mxu0 %v606
        %716 = vmatpush.xpose.msra.mxu0 %v604
        %717 = vmatpush.xpose.msra.mxu0 %v602
        %718 = vmatpush.xpose.msra.mxu0 %v600
        %719 = vmatpush.xpose.msra.mxu0 %v598
        %720 = vmatpush.xpose.msra.mxu0 %v596
        %721 = vmatmul.f32.gmra.mxu0 %v699
        %v722 = vpop.f32.mrf.mxu0
        %v723 = vadd.f32 0.0, %v722
        %724 = vdwg.mxu0
        %725 = vmatpush.xpose.msra.mxu0 %v703
        %726 = vmatpush.xpose.msra.mxu0 %v701
        %727 = vmatpush.xpose.msra.mxu0 %v654
        %728 = vmatpush.xpose.msra.mxu0 %v652
        %729 = vmatpush.xpose.msra.mxu0 %v650
        %730 = vmatpush.xpose.msra.mxu0 %v648
        %731 = vmatpush.xpose.msra.mxu0 %v646
        %732 = vmatpush.xpose.msra.mxu0 %v644
        %733 = vmatpush.xpose.msra.mxu0 %v642
        %734 = vmatpush.xpose.msra.mxu0 %v640
        %735 = vmatpush.xpose.msra.mxu0 %v638
        %736 = vmatpush.xpose.msra.mxu0 %v636
        %737 = vmatpush.xpose.msra.mxu0 %v634
        %738 = vmatpush.xpose.msra.mxu0 %v632
        %739 = vmatpush.xpose.msra.mxu0 %v630
        %740 = vmatpush.xpose.msra.mxu0 %v628
        %741 = vmatmul.f32.gmra.mxu0 %v699
        %v742 = vpop.f32.mrf.mxu0
        %v743 = vadd.f32 0.0, %v742
        %744 = vdwg.mxu0
        %v745 = vadd.f32 %v674, %v723
        %v746 = vadd.f32 %v694, %v743
        %s747 = scalar_lea.vmem %s1, 12
        %v748 = vld [vmem:[%s747] sm:$0xf]
        %v750 = vsel %vm481, %v748, 0
        %v752 = vsel %vm481, %v456, 0
        %v754 = vsel %vm481, %v458, 0
        %756 = vmatpush.xpose.msra.mxu0 %v519
        %757 = vmatpush.xpose.msra.mxu0 %v517
        %758 = vmatpush.xpose.msra.mxu0 %v515
        %759 = vmatpush.xpose.msra.mxu0 %v513
        %760 = vmatpush.xpose.msra.mxu0 %v511
        %761 = vmatpush.xpose.msra.mxu0 %v509
        %762 = vmatpush.xpose.msra.mxu0 %v507
        %763 = vmatpush.xpose.msra.mxu0 %v505
        %764 = vmatpush.xpose.msra.mxu0 %v503
        %765 = vmatpush.xpose.msra.mxu0 %v501
        %766 = vmatpush.xpose.msra.mxu0 %v499
        %767 = vmatpush.xpose.msra.mxu0 %v497
        %768 = vmatpush.xpose.msra.mxu0 %v495
        %769 = vmatpush.xpose.msra.mxu0 %v493
        %770 = vmatpush.xpose.msra.mxu0 %v491
        %771 = vmatpush.xpose.msra.mxu0 %v489
        %772 = vmatmul.f32.gmra.mxu0 %v750
        %v773 = vpop.f32.mrf.mxu0
        %v774 = vadd.f32 0.0, %v773
        %775 = vdwg.mxu0
        %776 = vmatpush.xpose.msra.mxu0 %v754
        %777 = vmatpush.xpose.msra.mxu0 %v752
        %778 = vmatpush.xpose.msra.mxu0 %v547
        %779 = vmatpush.xpose.msra.mxu0 %v545
        %780 = vmatpush.xpose.msra.mxu0 %v543
        %781 = vmatpush.xpose.msra.mxu0 %v541
        %782 = vmatpush.xpose.msra.mxu0 %v539
        %783 = vmatpush.xpose.msra.mxu0 %v537
        %784 = vmatpush.xpose.msra.mxu0 %v535
        %785 = vmatpush.xpose.msra.mxu0 %v533
        %786 = vmatpush.xpose.msra.mxu0 %v531
        %787 = vmatpush.xpose.msra.mxu0 %v529
        %788 = vmatpush.xpose.msra.mxu0 %v527
        %789 = vmatpush.xpose.msra.mxu0 %v525
        %790 = vmatpush.xpose.msra.mxu0 %v523
        %791 = vmatpush.xpose.msra.mxu0 %v521
        %792 = vmatmul.f32.gmra.mxu0 %v750
        %v793 = vpop.f32.mrf.mxu0
        %v794 = vadd.f32 0.0, %v793
        %795 = vdwg.mxu0
        %v796 = vadd.f32 %v745, %v774
        %v797 = vadd.f32 %v746, %v794
        %799 = vset.pattern.permute.xlu0 0
        %800 = vperm.xlu0 %799, %v477
        %v801 = vpop.permute.xlu0 %800
        %v803 = vadd.f32 %v796, %v801
        %v804 = vadd.f32 %v797, %v801
        %v807 = vrot.slane %v804, 4
        %vm808 = vcmask 1043456
        %v809 = vsel %vm808, %v803, %v807
        %811 = vst [vmem:[%s177] sm:$0xff] %v809
        %s812 = scalar_lea.vmem %s1, 16
        %v813 = vld [vmem:[%s812] sm:$0xf]
        %s814 = scalar_lea.vmem %s1, 20
        %v815 = vld [vmem:[%s814] sm:$0xf]
        %v817 = vsel %vm481, %v815, 0
        %v819 = vsel %vm481, %v373, 0
        %v821 = vsel %vm481, %v375, 0
        %v823 = vsel %vm481, %v378, 0
        %v825 = vsel %vm481, %v380, 0
        %v827 = vsel %vm481, %v383, 0
        %v829 = vsel %vm481, %v385, 0
        %v831 = vsel %vm481, %v388, 0
        %v833 = vsel %vm481, %v390, 0
        %v835 = vsel %vm481, %v393, 0
        %v837 = vsel %vm481, %v395, 0
        %v839 = vsel %vm481, %v398, 0
        %v841 = vsel %vm481, %v400, 0
        %v843 = vsel %vm481, %v403, 0
        %v845 = vsel %vm481, %v405, 0
        %v847 = vsel %vm481, %v408, 0
        %v849 = vsel %vm481, %v410, 0
        %v851 = vsel %vm481, %v413, 0
        %v853 = vsel %vm481, %v415, 0
        %v855 = vsel %vm481, %v418, 0
        %v857 = vsel %vm481, %v420, 0
        %v859 = vsel %vm481, %v423, 0
        %v861 = vsel %vm481, %v425, 0
        %v863 = vsel %vm481, %v428, 0
        %v865 = vsel %vm481, %v430, 0
        %v867 = vsel %vm481, %v433, 0
        %v869 = vsel %vm481, %v435, 0
        %v871 = vsel %vm481, %v438, 0
        %v873 = vsel %vm481, %v440, 0
        %v875 = vsel %vm481, %v443, 0
        %v877 = vsel %vm481, %v445, 0
        %v879 = vsel %vm481, %v448, 0
        %v881 = vsel %vm481, %v450, 0
        %883 = vmatpush.xpose.msra.mxu0 %v849
        %884 = vmatpush.xpose.msra.mxu0 %v847
        %885 = vmatpush.xpose.msra.mxu0 %v845
        %886 = vmatpush.xpose.msra.mxu0 %v843
        %887 = vmatpush.xpose.msra.mxu0 %v841
        %888 = vmatpush.xpose.msra.mxu0 %v839
        %889 = vmatpush.xpose.msra.mxu0 %v837
        %890 = vmatpush.xpose.msra.mxu0 %v835
        %891 = vmatpush.xpose.msra.mxu0 %v833
        %892 = vmatpush.xpose.msra.mxu0 %v831
        %893 = vmatpush.xpose.msra.mxu0 %v829
        %894 = vmatpush.xpose.msra.mxu0 %v827
        %895 = vmatpush.xpose.msra.mxu0 %v825
        %896 = vmatpush.xpose.msra.mxu0 %v823
        %897 = vmatpush.xpose.msra.mxu0 %v821
        %898 = vmatpush.xpose.msra.mxu0 %v819
        %899 = vmatmul.f32.gmra.mxu0 %v817
        %v900 = vpop.f32.mrf.mxu0
        %v901 = vadd.f32 0.0, %v900
        %902 = vdwg.mxu0
        %903 = vmatpush.xpose.msra.mxu0 %v881
        %904 = vmatpush.xpose.msra.mxu0 %v879
        %905 = vmatpush.xpose.msra.mxu0 %v877
        %906 = vmatpush.xpose.msra.mxu0 %v875
        %907 = vmatpush.xpose.msra.mxu0 %v873
        %908 = vmatpush.xpose.msra.mxu0 %v871
        %909 = vmatpush.xpose.msra.mxu0 %v869
        %910 = vmatpush.xpose.msra.mxu0 %v867
        %911 = vmatpush.xpose.msra.mxu0 %v865
        %912 = vmatpush.xpose.msra.mxu0 %v863
        %913 = vmatpush.xpose.msra.mxu0 %v861
        %914 = vmatpush.xpose.msra.mxu0 %v859
        %915 = vmatpush.xpose.msra.mxu0 %v857
        %916 = vmatpush.xpose.msra.mxu0 %v855
        %917 = vmatpush.xpose.msra.mxu0 %v853
        %918 = vmatpush.xpose.msra.mxu0 %v851
        %919 = vmatmul.f32.gmra.mxu0 %v817
        %v920 = vpop.f32.mrf.mxu0
        %v921 = vadd.f32 0.0, %v920
        %922 = vdwg.mxu0
        %v924 = vsel %vm481, %v813, 0
        %926 = vmatpush.xpose.msra.mxu0 %v515
        %927 = vmatpush.xpose.msra.mxu0 %v513
        %928 = vmatpush.xpose.msra.mxu0 %v511
        %929 = vmatpush.xpose.msra.mxu0 %v509
        %930 = vmatpush.xpose.msra.mxu0 %v507
        %931 = vmatpush.xpose.msra.mxu0 %v505
        %932 = vmatpush.xpose.msra.mxu0 %v503
        %933 = vmatpush.xpose.msra.mxu0 %v501
        %934 = vmatpush.xpose.msra.mxu0 %v499
        %935 = vmatpush.xpose.msra.mxu0 %v497
        %936 = vmatpush.xpose.msra.mxu0 %v495
        %937 = vmatpush.xpose.msra.mxu0 %v493
        %938 = vmatpush.xpose.msra.mxu0 %v491
        %939 = vmatpush.xpose.msra.mxu0 %v489
        %940 = vmatpush.xpose.msra.mxu0 %v487
        %941 = vmatpush.xpose.msra.mxu0 %v485
        %942 = vmatmul.f32.gmra.mxu0 %v924
        %v943 = vpop.f32.mrf.mxu0
        %v944 = vadd.f32 %v901, %v943
        %945 = vdwg.mxu0
        %946 = vmatpush.xpose.msra.mxu0 %v547
        %947 = vmatpush.xpose.msra.mxu0 %v545
        %948 = vmatpush.xpose.msra.mxu0 %v543
        %949 = vmatpush.xpose.msra.mxu0 %v541
        %950 = vmatpush.xpose.msra.mxu0 %v539
        %951 = vmatpush.xpose.msra.mxu0 %v537
        %952 = vmatpush.xpose.msra.mxu0 %v535
        %953 = vmatpush.xpose.msra.mxu0 %v533
        %954 = vmatpush.xpose.msra.mxu0 %v531
        %955 = vmatpush.xpose.msra.mxu0 %v529
        %956 = vmatpush.xpose.msra.mxu0 %v527
        %957 = vmatpush.xpose.msra.mxu0 %v525
        %958 = vmatpush.xpose.msra.mxu0 %v523
        %959 = vmatpush.xpose.msra.mxu0 %v521
        %960 = vmatpush.xpose.msra.mxu0 %v519
        %961 = vmatpush.xpose.msra.mxu0 %v517
        %962 = vmatmul.f32.gmra.mxu0 %v924
        %v963 = vpop.f32.mrf.mxu0
        %v964 = vadd.f32 %v921, %v963
        %965 = vdwg.mxu0
        %s966 = scalar_lea.vmem %s1, 24
        %v967 = vld [vmem:[%s966] sm:$0xf]
        %v969 = vsel %vm481, %v967, 0
        %971 = vmatpush.xpose.msra.mxu0 %v519
        %972 = vmatpush.xpose.msra.mxu0 %v517
        %973 = vmatpush.xpose.msra.mxu0 %v515
        %974 = vmatpush.xpose.msra.mxu0 %v513
        %975 = vmatpush.xpose.msra.mxu0 %v511
        %976 = vmatpush.xpose.msra.mxu0 %v509
        %977 = vmatpush.xpose.msra.mxu0 %v507
        %978 = vmatpush.xpose.msra.mxu0 %v505
        %979 = vmatpush.xpose.msra.mxu0 %v503
        %980 = vmatpush.xpose.msra.mxu0 %v501
        %981 = vmatpush.xpose.msra.mxu0 %v499
        %982 = vmatpush.xpose.msra.mxu0 %v497
        %983 = vmatpush.xpose.msra.mxu0 %v495
        %984 = vmatpush.xpose.msra.mxu0 %v493
        %985 = vmatpush.xpose.msra.mxu0 %v491
        %986 = vmatpush.xpose.msra.mxu0 %v489
        %987 = vmatmul.f32.gmra.mxu0 %v969
        %v988 = vpop.f32.mrf.mxu0
        %v989 = vadd.f32 0.0, %v988
        %990 = vdwg.mxu0
        %991 = vmatpush.xpose.msra.mxu0 %v754
        %992 = vmatpush.xpose.msra.mxu0 %v752
        %993 = vmatpush.xpose.msra.mxu0 %v547
        %994 = vmatpush.xpose.msra.mxu0 %v545
        %995 = vmatpush.xpose.msra.mxu0 %v543
        %996 = vmatpush.xpose.msra.mxu0 %v541
        %997 = vmatpush.xpose.msra.mxu0 %v539
        %998 = vmatpush.xpose.msra.mxu0 %v537
        %999 = vmatpush.xpose.msra.mxu0 %v535
        %1000 = vmatpush.xpose.msra.mxu0 %v533
        %1001 = vmatpush.xpose.msra.mxu0 %v531
        %1002 = vmatpush.xpose.msra.mxu0 %v529
        %1003 = vmatpush.xpose.msra.mxu0 %v527
        %1004 = vmatpush.xpose.msra.mxu0 %v525
        %1005 = vmatpush.xpose.msra.mxu0 %v523
        %1006 = vmatpush.xpose.msra.mxu0 %v521
        %1007 = vmatmul.f32.gmra.mxu0 %v969
        %v1008 = vpop.f32.mrf.mxu0
        %v1009 = vadd.f32 0.0, %v1008
        %1010 = vdwg.mxu0
        %v1011 = vadd.f32 %v944, %v989
        %v1012 = vadd.f32 %v964, %v1009
        %s1013 = scalar_lea.vmem %s1, 28
        %v1014 = vld [vmem:[%s1013] sm:$0xf]
        %v1016 = vsel %vm481, %v1014, 0
        %v1018 = vsel %vm481, %v461, 0
        %v1020 = vsel %vm481, %v463, 0
        %1022 = vmatpush.xpose.msra.mxu0 %v853
        %1023 = vmatpush.xpose.msra.mxu0 %v851
        %1024 = vmatpush.xpose.msra.mxu0 %v849
        %1025 = vmatpush.xpose.msra.mxu0 %v847
        %1026 = vmatpush.xpose.msra.mxu0 %v845
        %1027 = vmatpush.xpose.msra.mxu0 %v843
        %1028 = vmatpush.xpose.msra.mxu0 %v841
        %1029 = vmatpush.xpose.msra.mxu0 %v839
        %1030 = vmatpush.xpose.msra.mxu0 %v837
        %1031 = vmatpush.xpose.msra.mxu0 %v835
        %1032 = vmatpush.xpose.msra.mxu0 %v833
        %1033 = vmatpush.xpose.msra.mxu0 %v831
        %1034 = vmatpush.xpose.msra.mxu0 %v829
        %1035 = vmatpush.xpose.msra.mxu0 %v827
        %1036 = vmatpush.xpose.msra.mxu0 %v825
        %1037 = vmatpush.xpose.msra.mxu0 %v823
        %1038 = vmatmul.f32.gmra.mxu0 %v1016
        %v1039 = vpop.f32.mrf.mxu0
        %v1040 = vadd.f32 0.0, %v1039
        %1041 = vdwg.mxu0
        %1042 = vmatpush.xpose.msra.mxu0 %v1020
        %1043 = vmatpush.xpose.msra.mxu0 %v1018
        %1044 = vmatpush.xpose.msra.mxu0 %v881
        %1045 = vmatpush.xpose.msra.mxu0 %v879
        %1046 = vmatpush.xpose.msra.mxu0 %v877
        %1047 = vmatpush.xpose.msra.mxu0 %v875
        %1048 = vmatpush.xpose.msra.mxu0 %v873
        %1049 = vmatpush.xpose.msra.mxu0 %v871
        %1050 = vmatpush.xpose.msra.mxu0 %v869
        %1051 = vmatpush.xpose.msra.mxu0 %v867
        %1052 = vmatpush.xpose.msra.mxu0 %v865
        %1053 = vmatpush.xpose.msra.mxu0 %v863
        %1054 = vmatpush.xpose.msra.mxu0 %v861
        %1055 = vmatpush.xpose.msra.mxu0 %v859
        %1056 = vmatpush.xpose.msra.mxu0 %v857
        %1057 = vmatpush.xpose.msra.mxu0 %v855
        %1058 = vmatmul.f32.gmra.mxu0 %v1016
        %v1059 = vpop.f32.mrf.mxu0
        %v1060 = vadd.f32 0.0, %v1059
        %1061 = vdwg.mxu0
        %v1062 = vadd.f32 %v1011, %v1040
        %v1063 = vadd.f32 %v1012, %v1060
        %v1064 = vadd.f32 %v1062, %v801
        %v1065 = vadd.f32 %v1063, %v801
        %v1068 = vrot.slane %v1065, 4
        %v1069 = vsel %vm808, %v1064, %v1068
        %s1071 = scalar_lea.vmem %s177, 8 [#allocation2]
        %1072 = vst [vmem:[%s1071] sm:$0xff] %v1069
        %s1073 = scalar_lea.vmem %s1, 32
        %v1074 = vld [vmem:[%s1073] sm:$0xf]
        %s1075 = scalar_lea.vmem %s1, 36
        %v1076 = vld [vmem:[%s1075] sm:$0xf]
        %v1078 = vsel %vm481, %v1076, 0
        %1080 = vmatpush.xpose.msra.mxu0 %v519
        %1081 = vmatpush.xpose.msra.mxu0 %v517
        %1082 = vmatpush.xpose.msra.mxu0 %v515
        %1083 = vmatpush.xpose.msra.mxu0 %v513
        %1084 = vmatpush.xpose.msra.mxu0 %v511
        %1085 = vmatpush.xpose.msra.mxu0 %v509
        %1086 = vmatpush.xpose.msra.mxu0 %v507
        %1087 = vmatpush.xpose.msra.mxu0 %v505
        %1088 = vmatpush.xpose.msra.mxu0 %v503
        %1089 = vmatpush.xpose.msra.mxu0 %v501
        %1090 = vmatpush.xpose.msra.mxu0 %v499
        %1091 = vmatpush.xpose.msra.mxu0 %v497
        %1092 = vmatpush.xpose.msra.mxu0 %v495
        %1093 = vmatpush.xpose.msra.mxu0 %v493
        %1094 = vmatpush.xpose.msra.mxu0 %v491
        %1095 = vmatpush.xpose.msra.mxu0 %v489
        %1096 = vmatmul.f32.gmra.mxu0 %v1078
        %v1097 = vpop.f32.mrf.mxu0
        %v1098 = vadd.f32 0.0, %v1097
        %1099 = vdwg.mxu0
        %1100 = vmatpush.xpose.msra.mxu0 %v754
        %1101 = vmatpush.xpose.msra.mxu0 %v752
        %1102 = vmatpush.xpose.msra.mxu0 %v547
        %1103 = vmatpush.xpose.msra.mxu0 %v545
        %1104 = vmatpush.xpose.msra.mxu0 %v543
        %1105 = vmatpush.xpose.msra.mxu0 %v541
        %1106 = vmatpush.xpose.msra.mxu0 %v539
        %1107 = vmatpush.xpose.msra.mxu0 %v537
        %1108 = vmatpush.xpose.msra.mxu0 %v535
        %1109 = vmatpush.xpose.msra.mxu0 %v533
        %1110 = vmatpush.xpose.msra.mxu0 %v531
        %1111 = vmatpush.xpose.msra.mxu0 %v529
        %1112 = vmatpush.xpose.msra.mxu0 %v527
        %1113 = vmatpush.xpose.msra.mxu0 %v525
        %1114 = vmatpush.xpose.msra.mxu0 %v523
        %1115 = vmatpush.xpose.msra.mxu0 %v521
        %1116 = vmatmul.f32.gmra.mxu0 %v1078
        %v1117 = vpop.f32.mrf.mxu0
        %v1118 = vadd.f32 0.0, %v1117
        %1119 = vdwg.mxu0
        %v1121 = vsel %vm481, %v1074, 0
        %1123 = vmatpush.xpose.msra.mxu0 %v626
        %1124 = vmatpush.xpose.msra.mxu0 %v624
        %1125 = vmatpush.xpose.msra.mxu0 %v622
        %1126 = vmatpush.xpose.msra.mxu0 %v620
        %1127 = vmatpush.xpose.msra.mxu0 %v618
        %1128 = vmatpush.xpose.msra.mxu0 %v616
        %1129 = vmatpush.xpose.msra.mxu0 %v614
        %1130 = vmatpush.xpose.msra.mxu0 %v612
        %1131 = vmatpush.xpose.msra.mxu0 %v610
        %1132 = vmatpush.xpose.msra.mxu0 %v608
        %1133 = vmatpush.xpose.msra.mxu0 %v606
        %1134 = vmatpush.xpose.msra.mxu0 %v604
        %1135 = vmatpush.xpose.msra.mxu0 %v602
        %1136 = vmatpush.xpose.msra.mxu0 %v600
        %1137 = vmatpush.xpose.msra.mxu0 %v598
        %1138 = vmatpush.xpose.msra.mxu0 %v596
        %1139 = vmatmul.f32.gmra.mxu0 %v1121
        %v1140 = vpop.f32.mrf.mxu0
        %v1141 = vadd.f32 %v1098, %v1140
        %1142 = vdwg.mxu0
        %1143 = vmatpush.xpose.msra.mxu0 %v703
        %1144 = vmatpush.xpose.msra.mxu0 %v701
        %1145 = vmatpush.xpose.msra.mxu0 %v654
        %1146 = vmatpush.xpose.msra.mxu0 %v652
        %1147 = vmatpush.xpose.msra.mxu0 %v650
        %1148 = vmatpush.xpose.msra.mxu0 %v648
        %1149 = vmatpush.xpose.msra.mxu0 %v646
        %1150 = vmatpush.xpose.msra.mxu0 %v644
        %1151 = vmatpush.xpose.msra.mxu0 %v642
        %1152 = vmatpush.xpose.msra.mxu0 %v640
        %1153 = vmatpush.xpose.msra.mxu0 %v638
        %1154 = vmatpush.xpose.msra.mxu0 %v636
        %1155 = vmatpush.xpose.msra.mxu0 %v634
        %1156 = vmatpush.xpose.msra.mxu0 %v632
        %1157 = vmatpush.xpose.msra.mxu0 %v630
        %1158 = vmatpush.xpose.msra.mxu0 %v628
        %1159 = vmatmul.f32.gmra.mxu0 %v1121
        %v1160 = vpop.f32.mrf.mxu0
        %v1161 = vadd.f32 %v1118, %v1160
        %1162 = vdwg.mxu0
        %s1163 = scalar_lea.vmem %s1, 40
        %v1164 = vld [vmem:[%s1163] sm:$0xf]
        %v1166 = vsel %vm481, %v1164, 0
        %v1168 = vsel %vm481, %v238, 0
        %v1170 = vsel %vm481, %v239, 0
        %1172 = vmatpush.xpose.msra.mxu0 %v630
        %1173 = vmatpush.xpose.msra.mxu0 %v628
        %1174 = vmatpush.xpose.msra.mxu0 %v626
        %1175 = vmatpush.xpose.msra.mxu0 %v624
        %1176 = vmatpush.xpose.msra.mxu0 %v622
        %1177 = vmatpush.xpose.msra.mxu0 %v620
        %1178 = vmatpush.xpose.msra.mxu0 %v618
        %1179 = vmatpush.xpose.msra.mxu0 %v616
        %1180 = vmatpush.xpose.msra.mxu0 %v614
        %1181 = vmatpush.xpose.msra.mxu0 %v612
        %1182 = vmatpush.xpose.msra.mxu0 %v610
        %1183 = vmatpush.xpose.msra.mxu0 %v608
        %1184 = vmatpush.xpose.msra.mxu0 %v606
        %1185 = vmatpush.xpose.msra.mxu0 %v604
        %1186 = vmatpush.xpose.msra.mxu0 %v602
        %1187 = vmatpush.xpose.msra.mxu0 %v600
        %1188 = vmatmul.f32.gmra.mxu0 %v1166
        %v1189 = vpop.f32.mrf.mxu0
        %v1190 = vadd.f32 0.0, %v1189
        %1191 = vdwg.mxu0
        %1192 = vmatpush.xpose.msra.mxu0 %v1170
        %1193 = vmatpush.xpose.msra.mxu0 %v1168
        %1194 = vmatpush.xpose.msra.mxu0 %v703
        %1195 = vmatpush.xpose.msra.mxu0 %v701
        %1196 = vmatpush.xpose.msra.mxu0 %v654
        %1197 = vmatpush.xpose.msra.mxu0 %v652
        %1198 = vmatpush.xpose.msra.mxu0 %v650
        %1199 = vmatpush.xpose.msra.mxu0 %v648
        %1200 = vmatpush.xpose.msra.mxu0 %v646
        %1201 = vmatpush.xpose.msra.mxu0 %v644
        %1202 = vmatpush.xpose.msra.mxu0 %v642
        %1203 = vmatpush.xpose.msra.mxu0 %v640
        %1204 = vmatpush.xpose.msra.mxu0 %v638
        %1205 = vmatpush.xpose.msra.mxu0 %v636
        %1206 = vmatpush.xpose.msra.mxu0 %v634
        %1207 = vmatpush.xpose.msra.mxu0 %v632
        %1208 = vmatmul.f32.gmra.mxu0 %v1166
        %v1209 = vpop.f32.mrf.mxu0
        %v1210 = vadd.f32 0.0, %v1209
        %1211 = vdwg.mxu0
        %v1212 = vadd.f32 %v1141, %v1190
        %v1213 = vadd.f32 %v1161, %v1210
        %s1214 = scalar_lea.vmem %s1, 44
        %v1215 = vld [vmem:[%s1214] sm:$0xf]
        %v1217 = vsel %vm481, %v1215, 0
        %v1219 = vsel %vm481, %v469, 0
        %v1221 = vsel %vm481, %v471, 0
        %1223 = vmatpush.xpose.msra.mxu0 %v523
        %1224 = vmatpush.xpose.msra.mxu0 %v521
        %1225 = vmatpush.xpose.msra.mxu0 %v519
        %1226 = vmatpush.xpose.msra.mxu0 %v517
        %1227 = vmatpush.xpose.msra.mxu0 %v515
        %1228 = vmatpush.xpose.msra.mxu0 %v513
        %1229 = vmatpush.xpose.msra.mxu0 %v511
        %1230 = vmatpush.xpose.msra.mxu0 %v509
        %1231 = vmatpush.xpose.msra.mxu0 %v507
        %1232 = vmatpush.xpose.msra.mxu0 %v505
        %1233 = vmatpush.xpose.msra.mxu0 %v503
        %1234 = vmatpush.xpose.msra.mxu0 %v501
        %1235 = vmatpush.xpose.msra.mxu0 %v499
        %1236 = vmatpush.xpose.msra.mxu0 %v497
        %1237 = vmatpush.xpose.msra.mxu0 %v495
        %1238 = vmatpush.xpose.msra.mxu0 %v493
        %1239 = vmatmul.f32.gmra.mxu0 %v1217
        %v1240 = vpop.f32.mrf.mxu0
        %v1241 = vadd.f32 0.0, %v1240
        %1242 = vdwg.mxu0
        %1243 = vmatpush.xpose.msra.mxu0 %v1221
        %1244 = vmatpush.xpose.msra.mxu0 %v1219
        %1245 = vmatpush.xpose.msra.mxu0 %v754
        %1246 = vmatpush.xpose.msra.mxu0 %v752
        %1247 = vmatpush.xpose.msra.mxu0 %v547
        %1248 = vmatpush.xpose.msra.mxu0 %v545
        %1249 = vmatpush.xpose.msra.mxu0 %v543
        %1250 = vmatpush.xpose.msra.mxu0 %v541
        %1251 = vmatpush.xpose.msra.mxu0 %v539
        %1252 = vmatpush.xpose.msra.mxu0 %v537
        %1253 = vmatpush.xpose.msra.mxu0 %v535
        %1254 = vmatpush.xpose.msra.mxu0 %v533
        %1255 = vmatpush.xpose.msra.mxu0 %v531
        %1256 = vmatpush.xpose.msra.mxu0 %v529
        %1257 = vmatpush.xpose.msra.mxu0 %v527
        %1258 = vmatpush.xpose.msra.mxu0 %v525
        %1259 = vmatmul.f32.gmra.mxu0 %v1217
        %v1260 = vpop.f32.mrf.mxu0
        %v1261 = vadd.f32 0.0, %v1260
        %1262 = vdwg.mxu0
        %v1263 = vadd.f32 %v1212, %v1241
        %v1264 = vadd.f32 %v1213, %v1261
        %v1265 = vadd.f32 %v1263, %v801
        %v1266 = vadd.f32 %v1264, %v801
        %v1269 = vrot.slane %v1266, 4
        %v1270 = vsel %vm808, %v1265, %v1269
        %s1272 = scalar_lea.vmem %s177, 16 [#allocation2]
        %1273 = vst [vmem:[%s1272] sm:$0xff] %v1270
        %s1274 = scalar_lea.vmem %s1, 48
        %v1275 = vld [vmem:[%s1274] sm:$0xf]
        %s1276 = scalar_lea.vmem %s1, 52
        %v1277 = vld [vmem:[%s1276] sm:$0xf]
        %v1279 = vsel %vm481, %v1277, 0
        %1281 = vmatpush.xpose.msra.mxu0 %v853
        %1282 = vmatpush.xpose.msra.mxu0 %v851
        %1283 = vmatpush.xpose.msra.mxu0 %v849
        %1284 = vmatpush.xpose.msra.mxu0 %v847
        %1285 = vmatpush.xpose.msra.mxu0 %v845
        %1286 = vmatpush.xpose.msra.mxu0 %v843
        %1287 = vmatpush.xpose.msra.mxu0 %v841
        %1288 = vmatpush.xpose.msra.mxu0 %v839
        %1289 = vmatpush.xpose.msra.mxu0 %v837
        %1290 = vmatpush.xpose.msra.mxu0 %v835
        %1291 = vmatpush.xpose.msra.mxu0 %v833
        %1292 = vmatpush.xpose.msra.mxu0 %v831
        %1293 = vmatpush.xpose.msra.mxu0 %v829
        %1294 = vmatpush.xpose.msra.mxu0 %v827
        %1295 = vmatpush.xpose.msra.mxu0 %v825
        %1296 = vmatpush.xpose.msra.mxu0 %v823
        %1297 = vmatmul.f32.gmra.mxu0 %v1279
        %v1298 = vpop.f32.mrf.mxu0
        %v1299 = vadd.f32 0.0, %v1298
        %1300 = vdwg.mxu0
        %1301 = vmatpush.xpose.msra.mxu0 %v1020
        %1302 = vmatpush.xpose.msra.mxu0 %v1018
        %1303 = vmatpush.xpose.msra.mxu0 %v881
        %1304 = vmatpush.xpose.msra.mxu0 %v879
        %1305 = vmatpush.xpose.msra.mxu0 %v877
        %1306 = vmatpush.xpose.msra.mxu0 %v875
        %1307 = vmatpush.xpose.msra.mxu0 %v873
        %1308 = vmatpush.xpose.msra.mxu0 %v871
        %1309 = vmatpush.xpose.msra.mxu0 %v869
        %1310 = vmatpush.xpose.msra.mxu0 %v867
        %1311 = vmatpush.xpose.msra.mxu0 %v865
        %1312 = vmatpush.xpose.msra.mxu0 %v863
        %1313 = vmatpush.xpose.msra.mxu0 %v861
        %1314 = vmatpush.xpose.msra.mxu0 %v859
        %1315 = vmatpush.xpose.msra.mxu0 %v857
        %1316 = vmatpush.xpose.msra.mxu0 %v855
        %1317 = vmatmul.f32.gmra.mxu0 %v1279
        %v1318 = vpop.f32.mrf.mxu0
        %v1319 = vadd.f32 0.0, %v1318
        %1320 = vdwg.mxu0
        %v1322 = vsel %vm481, %v1275, 0
        %1324 = vmatpush.xpose.msra.mxu0 %v519
        %1325 = vmatpush.xpose.msra.mxu0 %v517
        %1326 = vmatpush.xpose.msra.mxu0 %v515
        %1327 = vmatpush.xpose.msra.mxu0 %v513
        %1328 = vmatpush.xpose.msra.mxu0 %v511
        %1329 = vmatpush.xpose.msra.mxu0 %v509
        %1330 = vmatpush.xpose.msra.mxu0 %v507
        %1331 = vmatpush.xpose.msra.mxu0 %v505
        %1332 = vmatpush.xpose.msra.mxu0 %v503
        %1333 = vmatpush.xpose.msra.mxu0 %v501
        %1334 = vmatpush.xpose.msra.mxu0 %v499
        %1335 = vmatpush.xpose.msra.mxu0 %v497
        %1336 = vmatpush.xpose.msra.mxu0 %v495
        %1337 = vmatpush.xpose.msra.mxu0 %v493
        %1338 = vmatpush.xpose.msra.mxu0 %v491
        %1339 = vmatpush.xpose.msra.mxu0 %v489
        %1340 = vmatmul.f32.gmra.mxu0 %v1322
        %v1341 = vpop.f32.mrf.mxu0
        %v1342 = vadd.f32 %v1299, %v1341
        %1343 = vdwg.mxu0
        %1344 = vmatpush.xpose.msra.mxu0 %v754
        %1345 = vmatpush.xpose.msra.mxu0 %v752
        %1346 = vmatpush.xpose.msra.mxu0 %v547
        %1347 = vmatpush.xpose.msra.mxu0 %v545
        %1348 = vmatpush.xpose.msra.mxu0 %v543
        %1349 = vmatpush.xpose.msra.mxu0 %v541
        %1350 = vmatpush.xpose.msra.mxu0 %v539
        %1351 = vmatpush.xpose.msra.mxu0 %v537
        %1352 = vmatpush.xpose.msra.mxu0 %v535
        %1353 = vmatpush.xpose.msra.mxu0 %v533
        %1354 = vmatpush.xpose.msra.mxu0 %v531
        %1355 = vmatpush.xpose.msra.mxu0 %v529
        %1356 = vmatpush.xpose.msra.mxu0 %v527
        %1357 = vmatpush.xpose.msra.mxu0 %v525
        %1358 = vmatpush.xpose.msra.mxu0 %v523
        %1359 = vmatpush.xpose.msra.mxu0 %v521
        %1360 = vmatmul.f32.gmra.mxu0 %v1322
        %v1361 = vpop.f32.mrf.mxu0
        %v1362 = vadd.f32 %v1319, %v1361
        %1363 = vdwg.mxu0
        %s1364 = scalar_lea.vmem %s1, 56
        %v1365 = vld [vmem:[%s1364] sm:$0xf]
        %v1367 = vsel %vm481, %v1365, 0
        %1369 = vmatpush.xpose.msra.mxu0 %v523
        %1370 = vmatpush.xpose.msra.mxu0 %v521
        %1371 = vmatpush.xpose.msra.mxu0 %v519
        %1372 = vmatpush.xpose.msra.mxu0 %v517
        %1373 = vmatpush.xpose.msra.mxu0 %v515
        %1374 = vmatpush.xpose.msra.mxu0 %v513
        %1375 = vmatpush.xpose.msra.mxu0 %v511
        %1376 = vmatpush.xpose.msra.mxu0 %v509
        %1377 = vmatpush.xpose.msra.mxu0 %v507
        %1378 = vmatpush.xpose.msra.mxu0 %v505
        %1379 = vmatpush.xpose.msra.mxu0 %v503
        %1380 = vmatpush.xpose.msra.mxu0 %v501
        %1381 = vmatpush.xpose.msra.mxu0 %v499
        %1382 = vmatpush.xpose.msra.mxu0 %v497
        %1383 = vmatpush.xpose.msra.mxu0 %v495
        %1384 = vmatpush.xpose.msra.mxu0 %v493
        %1385 = vmatmul.f32.gmra.mxu0 %v1367
        %v1386 = vpop.f32.mrf.mxu0
        %v1387 = vadd.f32 0.0, %v1386
        %1388 = vdwg.mxu0
        %1389 = vmatpush.xpose.msra.mxu0 %v1221
        %1390 = vmatpush.xpose.msra.mxu0 %v1219
        %1391 = vmatpush.xpose.msra.mxu0 %v754
        %1392 = vmatpush.xpose.msra.mxu0 %v752
        %1393 = vmatpush.xpose.msra.mxu0 %v547
        %1394 = vmatpush.xpose.msra.mxu0 %v545
        %1395 = vmatpush.xpose.msra.mxu0 %v543
        %1396 = vmatpush.xpose.msra.mxu0 %v541
        %1397 = vmatpush.xpose.msra.mxu0 %v539
        %1398 = vmatpush.xpose.msra.mxu0 %v537
        %1399 = vmatpush.xpose.msra.mxu0 %v535
        %1400 = vmatpush.xpose.msra.mxu0 %v533
        %1401 = vmatpush.xpose.msra.mxu0 %v531
        %1402 = vmatpush.xpose.msra.mxu0 %v529
        %1403 = vmatpush.xpose.msra.mxu0 %v527
        %1404 = vmatpush.xpose.msra.mxu0 %v525
        %1405 = vmatmul.f32.gmra.mxu0 %v1367
        %v1406 = vpop.f32.mrf.mxu0
        %v1407 = vadd.f32 0.0, %v1406
        %1408 = vdwg.mxu0
        %v1409 = vadd.f32 %v1342, %v1387
        %v1410 = vadd.f32 %v1362, %v1407
        %s1411 = scalar_lea.vmem %s1, 60
        %v1412 = vld [vmem:[%s1411] sm:$0xf]
        %v1414 = vsel %vm481, %v1412, 0
        %v1416 = vsel %vm481, %v474, 0
        %v1418 = vsel %vm481, %v476, 0
        %1420 = vmatpush.xpose.msra.mxu0 %v857
        %1421 = vmatpush.xpose.msra.mxu0 %v855
        %1422 = vmatpush.xpose.msra.mxu0 %v853
        %1423 = vmatpush.xpose.msra.mxu0 %v851
        %1424 = vmatpush.xpose.msra.mxu0 %v849
        %1425 = vmatpush.xpose.msra.mxu0 %v847
        %1426 = vmatpush.xpose.msra.mxu0 %v845
        %1427 = vmatpush.xpose.msra.mxu0 %v843
        %1428 = vmatpush.xpose.msra.mxu0 %v841
        %1429 = vmatpush.xpose.msra.mxu0 %v839
        %1430 = vmatpush.xpose.msra.mxu0 %v837
        %1431 = vmatpush.xpose.msra.mxu0 %v835
        %1432 = vmatpush.xpose.msra.mxu0 %v833
        %1433 = vmatpush.xpose.msra.mxu0 %v831
        %1434 = vmatpush.xpose.msra.mxu0 %v829
        %1435 = vmatpush.xpose.msra.mxu0 %v827
        %1436 = vmatmul.f32.gmra.mxu0 %v1414
        %v1437 = vpop.f32.mrf.mxu0
        %v1438 = vadd.f32 0.0, %v1437
        %1439 = vdwg.mxu0
        %1440 = vmatpush.xpose.msra.mxu0 %v1418
        %1441 = vmatpush.xpose.msra.mxu0 %v1416
        %1442 = vmatpush.xpose.msra.mxu0 %v1020
        %1443 = vmatpush.xpose.msra.mxu0 %v1018
        %1444 = vmatpush.xpose.msra.mxu0 %v881
        %1445 = vmatpush.xpose.msra.mxu0 %v879
        %1446 = vmatpush.xpose.msra.mxu0 %v877
        %1447 = vmatpush.xpose.msra.mxu0 %v875
        %1448 = vmatpush.xpose.msra.mxu0 %v873
        %1449 = vmatpush.xpose.msra.mxu0 %v871
        %1450 = vmatpush.xpose.msra.mxu0 %v869
        %1451 = vmatpush.xpose.msra.mxu0 %v867
        %1452 = vmatpush.xpose.msra.mxu0 %v865
        %1453 = vmatpush.xpose.msra.mxu0 %v863
        %1454 = vmatpush.xpose.msra.mxu0 %v861
        %1455 = vmatpush.xpose.msra.mxu0 %v859
        %1456 = vmatmul.f32.gmra.mxu0 %v1414
        %v1457 = vpop.f32.mrf.mxu0
        %v1458 = vadd.f32 0.0, %v1457
        %1459 = vdwg.mxu0
        %v1460 = vadd.f32 %v1409, %v1438
        %v1461 = vadd.f32 %v1410, %v1458
        %v1462 = vadd.f32 %v1460, %v801
        %v1463 = vadd.f32 %v1461, %v801
        %v1466 = vrot.slane %v1463, 4
        %v1467 = vsel %vm808, %v1462, %v1466
        %s1469 = scalar_lea.vmem %s177, 24 [#allocation2]
        %1470 = vst [vmem:[%s1469] sm:$0xff] %v1467
        %s1471 = sand.u32 %s107, 1
        %s1472 = scalar_lea.sflag [#allocation3], %s1471
        %s1473 = sand.u32 %s107, 1
        %s1474 = smul.addr %s1473, 32
        %s1475 = scalar_lea.vmem [#allocation2], %s1474
        // Predicated region
        $region33: #{tpu_custom_call.1} parent=31 // pred_check
          %p1476 = pneg %p117
        $region34: #{tpu_custom_call.1} parent=31 // pred_check_branch
          %1478 = sbr.rel (%p1476) target = $region36
        $region35: #{tpu_custom_call.1} parent=31 // pred_region
          %s1479 = smul.u32 2, %s22
          %1481 = vsyncadd %s1472, 0
          %s1482 = smul.addr %s21, 8
          %s1483 = sadd.s32 %s1479, %s1482
          %s1484 = smul.addr %s1483, 4
          %s1485 = scalar_lea.hbm %s3, %s1484
          %s1486 = sshll.u32 %s1475, 4
          %s1487 = int_to_ptr.vmem [resolvable:$true] %s1486
          %s1488 = sshll.u32 %s1485, 4
          %s1489 = int_to_ptr.hbm [resolvable:$true] %s1488
          %1494 = dma.vmem_to_hbm [thread:$0]  %s1487, 512, %s1489, %s1472, 128, 128, 8
        $region36: #{tpu_custom_call.1} parent=31 // pred_fallthru
          _
      $region32: #{tpu_custom_call.1} parent=5 // pred_fallthru
        _
      %p1495 = scmp.le.s32.totalorder 2, %s12
      // Predicated region
      $region37: #{tpu_custom_call.1} parent=5 // pred_check
        %p1496 = pneg %p1495
      $region38: #{tpu_custom_call.1} parent=5 // pred_check_branch
        %1498 = sbr.rel (%p1496) target = $region40
      $region39: #{tpu_custom_call.1} parent=5 // pred_region
        %s1499 = ssub.s32 %s12, 2
        // Predicated region
        $region41: #{tpu_custom_call.1} parent=39 // pred_check
          %p1500 = pneg %p123
        $region42: #{tpu_custom_call.1} parent=39 // pred_check_branch
          %1502 = sbr.rel (%p1500) target = $region44
        $region43: #{tpu_custom_call.1} parent=39 // pred_region
          %s1503 = sand.u32 %s108, 1
          %s1504 = scalar_lea.sflag [#allocation3], %s1503
          %s1505 = sand.u32 %s108, 1
          %s1506 = smul.addr %s1505, 32
          %s1507 = scalar_lea.vmem [#allocation2], %s1506
          %1509 = dma.done %s1504, 512
        $region44: #{tpu_custom_call.1} parent=39 // pred_fallthru
          _
      $region40: #{tpu_custom_call.1} parent=5 // pred_fallthru
        _
    $region6: #{tpu_custom_call.1} parent=1 // loop_footer
      %s16 = sadd.s32 1, %s12
    $region7: #{tpu_custom_call.1} parent=1 // loop_footer_branch
      %11 = sbr.rel target = $region3
    $region8: #{tpu_custom_call.1} parent=1 // loop_exit
      _
    %1510 = vsyncpa [#allocation3], 1
    %s1511 = scalar_lea.sflag [#allocation3], 1
    %1512 = vsyncpa %s1511, 1

</llo_original>
